<compile_context>
chip_gen: v6e
topology: v6e:2x2x1
jax: 0.10.0
libtpu: 0.0.40
codegen_flags: <defaults>
</compile_context>

<pallas_src>
import functools
import math

import jax
import jax.numpy as jnp
from jax.experimental import pallas as pl
from jax.experimental.pallas import tpu as pltpu  # noqa: F401  (TPU backend; no grid/params needed at this size)

CFG = dict(vocab_size=100, hidden=32, num_heads=2, head_dim=16,
           intermediate=64, num_layers=2, max_pos=16, type_vocab=2)


# ------------------------------ fused kernel -------------------------------

def _fused_bert_kernel(x_ref, mask_ref, w_ref, p_ref, out_ref, *,
                       num_layers, num_heads, head_dim, hidden, inter, n_cls):
    H, I, nh, hd = hidden, inter, num_heads, head_dim
    scale = 1.0 / math.sqrt(hd)

    def layernorm(v, g, b):                      # f32 LN over the hidden dim
        mean = jnp.mean(v, axis=-1, keepdims=True)
        vc = v - mean
        var = jnp.mean(vc * vc, axis=-1, keepdims=True)
        return vc * jax.lax.rsqrt(var + 1e-12) * g + b

    def matmul(a_bf16, w_bf16, bias_f32):        # bf16 MXU matmul, f32 accumulate
        return jnp.dot(a_bf16, w_bf16, preferred_element_type=jnp.float32) + bias_f32

    # Additive mask, pre-expanded to (nh, B*S, B*S) in the wrapper: no in-kernel broadcasts.
    mask = mask_ref[...]

    pe = p_ref[num_layers]                       # (8, 128) non-layer f32 params
    x = layernorm(x_ref[...], pe[0:1, 0:H], pe[1:2, 0:H])          # (B*S, H) f32

    for l in range(num_layers):                  # static unroll (L = 2)
        w = w_ref[l]                             # (H, 4H+2I) bf16 weight slab row
        p = p_ref[l]                             # (8, 128)   f32 bias/LN slab row
        qkv_w = w[:, 0:3 * H]                    # per-head-grouped columns [q_h k_h v_h]*nh
        o_w = w[:, 3 * H:4 * H]
        i_w = w[:, 4 * H:4 * H + I]
        f_wT = w[:, 4 * H + I:4 * H + 2 * I]     # FFN down-proj weight, stored transposed

        x_bf = x.astype(jnp.bfloat16)

        # ---- self-attention: ONE batched dot per stage over all B*nh heads ----
        qkv = matmul(x_bf, qkv_w, p[0:1, 0:3 * H]).astype(jnp.bfloat16)        # (B*S, 3H)
        qkv_h = jnp.stack([qkv[:, h * 3 * hd:(h + 1) * 3 * hd]
                           for h in range(nh)], axis=0)                        # (nh, B*S, 3hd)
        qh = qkv_h[:, :, 0:hd]
        kh = qkv_h[:, :, hd:2 * hd]
        vh = qkv_h[:, :, 2 * hd:3 * hd]
        # Scores over the flattened (B*S) key axis; block-diagonal mask keeps samples separate.
        s = jax.lax.dot_general(qh, kh, (((2,), (2,)), ((0,), (0,))),
                                preferred_element_type=jnp.float32) * scale + mask
        s = s - jnp.max(s, axis=-1, keepdims=True)
        pr = jnp.exp(s)
        pr = pr * pl.reciprocal(jnp.sum(pr, axis=-1, keepdims=True), approx=True)
        o = jax.lax.dot_general(pr.astype(jnp.bfloat16), vh, (((2,), (1,)), ((0,), (0,))),
                                preferred_element_type=jnp.float32)            # (nh, B*S, hd)
        o_cat = jnp.concatenate([o[h] for h in range(nh)],
                                axis=-1).astype(jnp.bfloat16)                  # (B*S, H)

        ao = matmul(o_cat, o_w, p[1:2, 0:H])
        x = layernorm(ao + x, p[2:3, 0:H], p[3:4, 0:H])

        # ---- FFN (gelu) + add & LN ----
        ff = matmul(x.astype(jnp.bfloat16), i_w, p[4:5, 0:I])                  # (B*S, I)
        # TODO(synk): HF BERT uses exact erf-GELU; tanh approximation used here.
        c = math.sqrt(2.0 / math.pi)
        ff = 0.5 * ff * (1.0 + jnp.tanh(c * (ff + 0.044715 * ff * ff * ff)))
        ff = jax.lax.dot_general(ff.astype(jnp.bfloat16), f_wT,
                                 (((1,), (1,)), ((), ())),
                                 preferred_element_type=jnp.float32) + p[5:6, 0:H]
        x = layernorm(ff + x, p[6:7, 0:H], p[7:8, 0:H])

    # ---- pooler + fused classifier heads ----
    # Computed for all B*S rows (same tile count as 2 rows); wrapper selects CLS rows in XLA.
    we = w_ref[num_layers]
    pooled = jnp.tanh(matmul(x.astype(jnp.bfloat16), we[:, 0:H], pe[2:3, 0:H]))
    out_ref[...] = matmul(pooled.astype(jnp.bfloat16), we[:, H:H + n_cls], pe[3:4, 0:n_cls])


# --------------------------- parameters & packing ---------------------------

def init_params(key, num_classes_bias, num_classes_fake):
    """Random-init small BERT (stand-in for bert-base-uncased, which can't be loaded here)."""
    H, I, L = CFG["hidden"], CFG["intermediate"], CFG["num_layers"]
    keys = iter(jax.random.split(key, 256))

    def w(shape):
        return jax.random.normal(next(keys), shape, jnp.float32) * 0.02

    layers = []
    for _ in range(L):
        layers.append(dict(
            q_w=w((H, H)), k_w=w((H, H)), v_w=w((H, H)),
            q_b=jnp.zeros((H,)), k_b=jnp.zeros((H,)), v_b=jnp.zeros((H,)),
            o_w=w((H, H)), o_b=jnp.zeros((H,)),
            ln1_g=jnp.ones((H,)), ln1_b=jnp.zeros((H,)),
            i_w=w((H, I)), i_b=jnp.zeros((I,)),
            f_w=w((I, H)), f_b=jnp.zeros((H,)),
            ln2_g=jnp.ones((H,)), ln2_b=jnp.zeros((H,)),
        ))
    return dict(
        word_emb=w((CFG["vocab_size"], H)),
        pos_emb=w((CFG["max_pos"], H)),
        type_emb=w((CFG["type_vocab"], H)),
        emb_ln_g=jnp.ones((H,)), emb_ln_b=jnp.zeros((H,)),
        layers=layers,
        pool_w=w((H, H)), pool_b=jnp.zeros((H,)),
        bias_w=w((H, num_classes_bias)), bias_b=jnp.zeros((num_classes_bias,)),
        fake_w=w((H, num_classes_fake)), fake_b=jnp.zeros((num_classes_fake,)),
    )


def pack_params(params):
    """Pack all encoder/head weights into one bf16 slab and one f32 slab (4 operands total)."""
    H, I, L = CFG["hidden"], CFG["intermediate"], CFG["num_layers"]
    nh, hd = CFG["num_heads"], CFG["head_dim"]
    LANES = 128
    w_cols = 4 * H + 2 * I
    n_cls = params["bias_b"].shape[0] + params["fake_b"].shape[0]

    def pad_row(v):
        v = jnp.asarray(v, jnp.float32).reshape(-1)
        return jnp.pad(v, (0, LANES - v.shape[0]))

    w_rows, p_rows = [], []
    for lyr in params["layers"]:
        # QKV weight/bias with columns grouped per head: [q_h | k_h | v_h] for h = 0..nh-1.
        qkv_w = jnp.concatenate(
            [jnp.concatenate([lyr["q_w"][:, h * hd:(h + 1) * hd],
                              lyr["k_w"][:, h * hd:(h + 1) * hd],
                              lyr["v_w"][:, h * hd:(h + 1) * hd]], axis=1)
             for h in range(nh)], axis=1)
        qkv_b = jnp.concatenate(
            [jnp.concatenate([lyr["q_b"][h * hd:(h + 1) * hd],
                              lyr["k_b"][h * hd:(h + 1) * hd],
                              lyr["v_b"][h * hd:(h + 1) * hd]]) for h in range(nh)])
        w_rows.append(jnp.concatenate(
            [qkv_w, lyr["o_w"], lyr["i_w"], lyr["f_w"].T], axis=1))            # (H, 4H+2I)
        p_rows.append(jnp.stack([pad_row(qkv_b), pad_row(lyr["o_b"]),
                                 pad_row(lyr["ln1_g"]), pad_row(lyr["ln1_b"]),
                                 pad_row(lyr["i_b"]), pad_row(lyr["f_b"]),
                                 pad_row(lyr["ln2_g"]), pad_row(lyr["ln2_b"])]))

    head_w = jnp.concatenate([params["bias_w"], params["fake_w"]], axis=1)     # (H, n_cls)
    w_rows.append(jnp.concatenate(
        [params["pool_w"], head_w,
         jnp.zeros((H, w_cols - H - n_cls), jnp.float32)], axis=1))
    head_b = jnp.concatenate([params["bias_b"], params["fake_b"]])
    p_rows.append(jnp.stack([pad_row(params["emb_ln_g"]), pad_row(params["emb_ln_b"]),
                             pad_row(params["pool_b"]), pad_row(head_b)]
                            + [jnp.zeros((LANES,), jnp.float32)] * 4))

    return dict(
        word_emb=params["word_emb"], pos_emb=params["pos_emb"], type_emb=params["type_emb"],
        wslab=jnp.stack(w_rows).astype(jnp.bfloat16),        # (L+1, H, 4H+2I) bf16
        pslab=jnp.stack(p_rows).astype(jnp.float32),         # (L+1, 8, 128)   f32
    )


# --------------------------------- forward ----------------------------------

def misinformation_forward(packed, input_ids, attention_mask, *,
                           num_classes_bias, num_classes_fake):
    B, S = input_ids.shape
    H, nh, hd = CFG["hidden"], CFG["num_heads"], CFG["head_dim"]
    L, I = CFG["num_layers"], CFG["intermediate"]
    BS = B * S
    n_cls = num_classes_bias + num_classes_fake

    # Embedding gathers stay in XLA (glue); everything else is ONE fused Pallas kernel.
    # TODO(synk): token_type_ids hard-coded to 0 (matches reference usage without type ids).
    x_emb = (packed["word_emb"][input_ids]
             + packed["pos_emb"][None, :S, :]
             + packed["type_emb"][0][None, None, :]).reshape(BS, H)

    # Additive attention mask over the flattened (B*S) key axis, pre-expanded for all heads:
    # block-diagonal (samples attend only within themselves) + HF-style -10000 on padded keys.
    bidx = jnp.arange(BS, dtype=jnp.int32) // S
    same = bidx[:, None] == bidx[None, :]
    key_ok = attention_mask.reshape(BS).astype(jnp.float32)
    mask2 = jnp.where(same, (1.0 - key_ok)[None, :] * -10000.0, -1.0e9)
    mask3 = jnp.broadcast_to(mask2[None], (nh, BS, BS)).astype(jnp.float32)

    kernel = functools.partial(_fused_bert_kernel, num_layers=L, num_heads=nh,
                               head_dim=hd, hidden=H, inter=I, n_cls=n_cls)
    # No grid / no BlockSpecs: 4 whole-array operands into VMEM, single invocation.
    logits_all = pl.pallas_call(
        kernel,
        out_shape=jax.ShapeDtypeStruct((BS, n_cls), jnp.float32),
    )(x_emb, mask3, packed["wslab"], packed["pslab"])

    logits = logits_all.reshape(B, S, n_cls)[:, 0, :]        # CLS rows, selected in XLA
    return logits[:, :num_classes_bias], logits[:, num_classes_bias:]


if __name__ == "__main__":
    key = jax.random.PRNGKey(0)
    pkey, dkey = jax.random.split(key)

    num_classes_bias, num_classes_fake_news = 3, 2
    params = init_params(pkey, num_classes_bias, num_classes_fake_news)
    packed = pack_params(params)

    B, S = 2, 8
    input_ids = jax.random.randint(dkey, (B, S), 0, CFG["vocab_size"], dtype=jnp.int32)
    attention_mask = jnp.ones((B, S), jnp.int32).at[1, 6:].set(0)   # pad tail of sample 1

    fwd = jax.jit(functools.partial(misinformation_forward,
                                    num_classes_bias=num_classes_bias,
                                    num_classes_fake=num_classes_fake_news))
    bias_logits, fake_news_logits = fwd(packed, input_ids, attention_mask)
    jax.block_until_ready((bias_logits, fake_news_logits))

    assert bias_logits.shape == (B, num_classes_bias)
    assert fake_news_logits.shape == (B, num_classes_fake_news)
    print("KERNEL_OK")
</pallas_src>

<mosaic_0001>
module attributes {stable_mosaic.version = 11 : i64} {
  func.func @_fused_bert_kernel(%arg0: memref<16x32xf32, #tpu.memory_space<vmem>>, %arg1: memref<2x16x16xf32, #tpu.memory_space<vmem>>, %arg2: memref<3x32x256xbf16, #tpu.memory_space<vmem>>, %arg3: memref<3x8x128xf32, #tpu.memory_space<vmem>>, %arg4: memref<16x5xf32, #tpu.memory_space<vmem>>) attributes {dimension_semantics = [], scalar_prefetch = 0 : i64, scratch_operands = 0 : i64, tpu.core_type = #tpu.core_type<tc>} {
    %c0 = arith.constant 0 : index
    %c0_0 = arith.constant 0 : index
    %c0_1 = arith.constant 0 : index
    %0 = vector.load %arg1[%c0, %c0_0, %c0_1] : memref<2x16x16xf32, #tpu.memory_space<vmem>>, vector<2x16x16xf32>
    %c2 = arith.constant 2 : index
    %c0_2 = arith.constant 0 : index
    %c0_3 = arith.constant 0 : index
    %1 = vector.load %arg3[%c2, %c0_2, %c0_3] : memref<3x8x128xf32, #tpu.memory_space<vmem>>, vector<1x8x128xf32>
    %2 = vector.shape_cast %1 : vector<1x8x128xf32> to vector<8x128xf32>
    %c0_4 = arith.constant 0 : index
    %c0_5 = arith.constant 0 : index
    %3 = vector.load %arg0[%c0_4, %c0_5] : memref<16x32xf32, #tpu.memory_space<vmem>>, vector<16x32xf32>
    %4 = vector.extract_strided_slice %2 {offsets = [0, 0], sizes = [1, 32], strides = [1, 1]} : vector<8x128xf32> to vector<1x32xf32>
    %5 = vector.extract_strided_slice %2 {offsets = [1, 0], sizes = [1, 32], strides = [1, 1]} : vector<8x128xf32> to vector<1x32xf32>
    %cst = arith.constant dense<0.000000e+00> : vector<16xf32>
    %6 = vector.multi_reduction <add>, %3, %cst [1] : vector<16x32xf32> to vector<16xf32>
    %7 = vector.shape_cast %6 : vector<16xf32> to vector<16x1xf32>
    %cst_6 = arith.constant 3.200000e+01 : f32
    %8 = vector.broadcast %cst_6 : f32 to vector<16x1xf32>
    %9 = arith.divf %7, %8 : vector<16x1xf32>
    %10 = vector.broadcast %9 : vector<16x1xf32> to vector<16x32xf32>
    %11 = arith.subf %3, %10 : vector<16x32xf32>
    %12 = arith.mulf %11, %11 : vector<16x32xf32>
    %cst_7 = arith.constant dense<0.000000e+00> : vector<16xf32>
    %13 = vector.multi_reduction <add>, %12, %cst_7 [1] : vector<16x32xf32> to vector<16xf32>
    %14 = vector.shape_cast %13 : vector<16xf32> to vector<16x1xf32>
    %cst_8 = arith.constant 3.200000e+01 : f32
    %15 = vector.broadcast %cst_8 : f32 to vector<16x1xf32>
    %16 = arith.divf %14, %15 : vector<16x1xf32>
    %cst_9 = arith.constant 9.99999996E-13 : f32
    %17 = vector.broadcast %cst_9 : f32 to vector<16x1xf32>
    %18 = arith.addf %16, %17 : vector<16x1xf32>
    %19 = math.rsqrt %18 : vector<16x1xf32>
    %20 = vector.broadcast %19 : vector<16x1xf32> to vector<16x32xf32>
    %21 = arith.mulf %11, %20 : vector<16x32xf32>
    %22 = vector.broadcast %4 : vector<1x32xf32> to vector<16x32xf32>
    %23 = arith.mulf %21, %22 : vector<16x32xf32>
    %24 = vector.broadcast %5 : vector<1x32xf32> to vector<16x32xf32>
    %25 = arith.addf %23, %24 : vector<16x32xf32>
    %c0_10 = arith.constant 0 : index
    %c0_11 = arith.constant 0 : index
    %c0_12 = arith.constant 0 : index
    %26 = vector.load %arg2[%c0_10, %c0_11, %c0_12] : memref<3x32x256xbf16, #tpu.memory_space<vmem>>, vector<1x32x256xbf16>
    %27 = vector.shape_cast %26 : vector<1x32x256xbf16> to vector<32x256xbf16>
    %c0_13 = arith.constant 0 : index
    %c0_14 = arith.constant 0 : index
    %c0_15 = arith.constant 0 : index
    %28 = vector.load %arg3[%c0_13, %c0_14, %c0_15] : memref<3x8x128xf32, #tpu.memory_space<vmem>>, vector<1x8x128xf32>
    %29 = vector.shape_cast %28 : vector<1x8x128xf32> to vector<8x128xf32>
    %30 = vector.extract_strided_slice %27 {offsets = [0, 0], sizes = [32, 96], strides = [1, 1]} : vector<32x256xbf16> to vector<32x96xbf16>
    %31 = vector.extract_strided_slice %27 {offsets = [0, 96], sizes = [32, 32], strides = [1, 1]} : vector<32x256xbf16> to vector<32x32xbf16>
    %32 = vector.extract_strided_slice %27 {offsets = [0, 128], sizes = [32, 64], strides = [1, 1]} : vector<32x256xbf16> to vector<32x64xbf16>
    %33 = vector.extract_strided_slice %27 {offsets = [0, 192], sizes = [32, 64], strides = [1, 1]} : vector<32x256xbf16> to vector<32x64xbf16>
    %34 = arith.truncf %25 : vector<16x32xf32> to vector<16x32xbf16>
    %35 = vector.extract_strided_slice %29 {offsets = [0, 0], sizes = [1, 96], strides = [1, 1]} : vector<8x128xf32> to vector<1x96xf32>
    %cst_16 = arith.constant dense<0.000000e+00> : vector<16x96xf32>
    %36 = tpu.matmul %34, %30, %cst_16 {dimension_numbers = #tpu.dot_dimension_numbers<[1], [0], [0], [1], [0, 0, 1, 1], [], []>} : vector<16x32xbf16>, vector<32x96xbf16>, vector<16x96xf32> -> vector<16x96xf32>
    %37 = vector.broadcast %35 : vector<1x96xf32> to vector<16x96xf32>
    %38 = arith.addf %36, %37 : vector<16x96xf32>
    %39 = arith.truncf %38 : vector<16x96xf32> to vector<16x96xbf16>
    %40 = vector.extract_strided_slice %39 {offsets = [0, 0], sizes = [16, 48], strides = [1, 1]} : vector<16x96xbf16> to vector<16x48xbf16>
    %41 = vector.extract_strided_slice %39 {offsets = [0, 48], sizes = [16, 48], strides = [1, 1]} : vector<16x96xbf16> to vector<16x48xbf16>
    %42 = vector.shape_cast %40 : vector<16x48xbf16> to vector<1x16x48xbf16>
    %43 = vector.shape_cast %41 : vector<16x48xbf16> to vector<1x16x48xbf16>
    %44 = tpu.concatenate %42, %43 in 0 : vector<1x16x48xbf16>, vector<1x16x48xbf16> -> vector<2x16x48xbf16>
    %45 = vector.extract_strided_slice %44 {offsets = [0, 0, 0], sizes = [2, 16, 16], strides = [1, 1, 1]} : vector<2x16x48xbf16> to vector<2x16x16xbf16>
    %46 = vector.extract_strided_slice %44 {offsets = [0, 0, 16], sizes = [2, 16, 16], strides = [1, 1, 1]} : vector<2x16x48xbf16> to vector<2x16x16xbf16>
    %47 = vector.extract_strided_slice %44 {offsets = [0, 0, 32], sizes = [2, 16, 16], strides = [1, 1, 1]} : vector<2x16x48xbf16> to vector<2x16x16xbf16>
    %cst_17 = arith.constant dense<0.000000e+00> : vector<2x16x16xf32>
    %48 = tpu.matmul %45, %46, %cst_17 {dimension_numbers = #tpu.dot_dimension_numbers<[2], [2], [1], [1], [0, 0, 0, 1, 1, 1], [0], [0]>} : vector<2x16x16xbf16>, vector<2x16x16xbf16>, vector<2x16x16xf32> -> vector<2x16x16xf32>
    %cst_18 = arith.constant 2.500000e-01 : f32
    %49 = vector.broadcast %cst_18 : f32 to vector<2x16x16xf32>
    %50 = arith.mulf %48, %49 : vector<2x16x16xf32>
    %51 = arith.addf %50, %0 : vector<2x16x16xf32>
    %cst_19 = arith.constant dense<0xFF800000> : vector<2x16xf32>
    %52 = vector.multi_reduction <maximumf>, %51, %cst_19 [2] : vector<2x16x16xf32> to vector<2x16xf32>
    %53 = vector.shape_cast %52 : vector<2x16xf32> to vector<2x16x1xf32>
    %54 = vector.broadcast %53 : vector<2x16x1xf32> to vector<2x16x16xf32>
    %55 = arith.subf %51, %54 : vector<2x16x16xf32>
    %56 = math.exp %55 : vector<2x16x16xf32>
    %cst_20 = arith.constant dense<0.000000e+00> : vector<2x16xf32>
    %57 = vector.multi_reduction <add>, %56, %cst_20 [2] : vector<2x16x16xf32> to vector<2x16xf32>
    %58 = vector.shape_cast %57 : vector<2x16xf32> to vector<2x16x1xf32>
    %59 = tpu.reciprocal %58 {approx = true} : vector<2x16x1xf32> -> vector<2x16x1xf32>
    %60 = vector.broadcast %59 : vector<2x16x1xf32> to vector<2x16x16xf32>
    %61 = arith.mulf %56, %60 : vector<2x16x16xf32>
    %62 = arith.truncf %61 : vector<2x16x16xf32> to vector<2x16x16xbf16>
    %cst_21 = arith.constant dense<0.000000e+00> : vector<2x16x16xf32>
    %63 = tpu.matmul %62, %47, %cst_21 {dimension_numbers = #tpu.dot_dimension_numbers<[2], [1], [1], [2], [0, 0, 0, 1, 1, 2], [0], [0]>} : vector<2x16x16xbf16>, vector<2x16x16xbf16>, vector<2x16x16xf32> -> vector<2x16x16xf32>
    %64 = vector.extract_strided_slice %63 {offsets = [0, 0, 0], sizes = [1, 16, 16], strides = [1, 1, 1]} : vector<2x16x16xf32> to vector<1x16x16xf32>
    %65 = vector.shape_cast %64 : vector<1x16x16xf32> to vector<16x16xf32>
    %66 = vector.extract_strided_slice %63 {offsets = [1, 0, 0], sizes = [1, 16, 16], strides = [1, 1, 1]} : vector<2x16x16xf32> to vector<1x16x16xf32>
    %67 = vector.shape_cast %66 : vector<1x16x16xf32> to vector<16x16xf32>
    %68 = tpu.concatenate %65, %67 in 1 : vector<16x16xf32>, vector<16x16xf32> -> vector<16x32xf32>
    %69 = arith.truncf %68 : vector<16x32xf32> to vector<16x32xbf16>
    %70 = vector.extract_strided_slice %29 {offsets = [1, 0], sizes = [1, 32], strides = [1, 1]} : vector<8x128xf32> to vector<1x32xf32>
    %cst_22 = arith.constant dense<0.000000e+00> : vector<16x32xf32>
    %71 = tpu.matmul %69, %31, %cst_22 {dimension_numbers = #tpu.dot_dimension_numbers<[1], [0], [0], [1], [0, 0, 1, 1], [], []>} : vector<16x32xbf16>, vector<32x32xbf16>, vector<16x32xf32> -> vector<16x32xf32>
    %72 = vector.broadcast %70 : vector<1x32xf32> to vector<16x32xf32>
    %73 = arith.addf %71, %72 : vector<16x32xf32>
    %74 = arith.addf %73, %25 : vector<16x32xf32>
    %75 = vector.extract_strided_slice %29 {offsets = [2, 0], sizes = [1, 32], strides = [1, 1]} : vector<8x128xf32> to vector<1x32xf32>
    %76 = vector.extract_strided_slice %29 {offsets = [3, 0], sizes = [1, 32], strides = [1, 1]} : vector<8x128xf32> to vector<1x32xf32>
    %cst_23 = arith.constant dense<0.000000e+00> : vector<16xf32>
    %77 = vector.multi_reduction <add>, %74, %cst_23 [1] : vector<16x32xf32> to vector<16xf32>
    %78 = vector.shape_cast %77 : vector<16xf32> to vector<16x1xf32>
    %cst_24 = arith.constant 3.200000e+01 : f32
    %79 = vector.broadcast %cst_24 : f32 to vector<16x1xf32>
    %80 = arith.divf %78, %79 : vector<16x1xf32>
    %81 = vector.broadcast %80 : vector<16x1xf32> to vector<16x32xf32>
    %82 = arith.subf %74, %81 : vector<16x32xf32>
    %83 = arith.mulf %82, %82 : vector<16x32xf32>
    %cst_25 = arith.constant dense<0.000000e+00> : vector<16xf32>
    %84 = vector.multi_reduction <add>, %83, %cst_25 [1] : vector<16x32xf32> to vector<16xf32>
    %85 = vector.shape_cast %84 : vector<16xf32> to vector<16x1xf32>
    %cst_26 = arith.constant 3.200000e+01 : f32
    %86 = vector.broadcast %cst_26 : f32 to vector<16x1xf32>
    %87 = arith.divf %85, %86 : vector<16x1xf32>
    %cst_27 = arith.constant 9.99999996E-13 : f32
    %88 = vector.broadcast %cst_27 : f32 to vector<16x1xf32>
    %89 = arith.addf %87, %88 : vector<16x1xf32>
    %90 = math.rsqrt %89 : vector<16x1xf32>
    %91 = vector.broadcast %90 : vector<16x1xf32> to vector<16x32xf32>
    %92 = arith.mulf %82, %91 : vector<16x32xf32>
    %93 = vector.broadcast %75 : vector<1x32xf32> to vector<16x32xf32>
    %94 = arith.mulf %92, %93 : vector<16x32xf32>
    %95 = vector.broadcast %76 : vector<1x32xf32> to vector<16x32xf32>
    %96 = arith.addf %94, %95 : vector<16x32xf32>
    %97 = arith.truncf %96 : vector<16x32xf32> to vector<16x32xbf16>
    %98 = vector.extract_strided_slice %29 {offsets = [4, 0], sizes = [1, 64], strides = [1, 1]} : vector<8x128xf32> to vector<1x64xf32>
    %cst_28 = arith.constant dense<0.000000e+00> : vector<16x64xf32>
    %99 = tpu.matmul %97, %32, %cst_28 {dimension_numbers = #tpu.dot_dimension_numbers<[1], [0], [0], [1], [0, 0, 1, 1], [], []>} : vector<16x32xbf16>, vector<32x64xbf16>, vector<16x64xf32> -> vector<16x64xf32>
    %100 = vector.broadcast %98 : vector<1x64xf32> to vector<16x64xf32>
    %101 = arith.addf %99, %100 : vector<16x64xf32>
    %cst_29 = arith.constant 5.000000e-01 : f32
    %102 = vector.broadcast %cst_29 : f32 to vector<16x64xf32>
    %103 = arith.mulf %102, %101 : vector<16x64xf32>
    %cst_30 = arith.constant 4.471500e-02 : f32
    %104 = vector.broadcast %cst_30 : f32 to vector<16x64xf32>
    %105 = arith.mulf %104, %101 : vector<16x64xf32>
    %106 = arith.mulf %105, %101 : vector<16x64xf32>
    %107 = arith.mulf %106, %101 : vector<16x64xf32>
    %108 = arith.addf %101, %107 : vector<16x64xf32>
    %cst_31 = arith.constant 0.797884583 : f32
    %109 = vector.broadcast %cst_31 : f32 to vector<16x64xf32>
    %110 = arith.mulf %109, %108 : vector<16x64xf32>
    %111 = math.tanh %110 : vector<16x64xf32>
    %cst_32 = arith.constant 1.000000e+00 : f32
    %112 = vector.broadcast %cst_32 : f32 to vector<16x64xf32>
    %113 = arith.addf %112, %111 : vector<16x64xf32>
    %114 = arith.mulf %103, %113 : vector<16x64xf32>
    %115 = arith.truncf %114 : vector<16x64xf32> to vector<16x64xbf16>
    %cst_33 = arith.constant dense<0.000000e+00> : vector<16x32xf32>
    %116 = tpu.matmul %115, %33, %cst_33 {dimension_numbers = #tpu.dot_dimension_numbers<[1], [1], [0], [0], [0, 0, 1, 0], [], []>} : vector<16x64xbf16>, vector<32x64xbf16>, vector<16x32xf32> -> vector<16x32xf32>
    %117 = vector.extract_strided_slice %29 {offsets = [5, 0], sizes = [1, 32], strides = [1, 1]} : vector<8x128xf32> to vector<1x32xf32>
    %118 = vector.broadcast %117 : vector<1x32xf32> to vector<16x32xf32>
    %119 = arith.addf %116, %118 : vector<16x32xf32>
    %120 = arith.addf %119, %96 : vector<16x32xf32>
    %121 = vector.extract_strided_slice %29 {offsets = [6, 0], sizes = [1, 32], strides = [1, 1]} : vector<8x128xf32> to vector<1x32xf32>
    %122 = vector.extract_strided_slice %29 {offsets = [7, 0], sizes = [1, 32], strides = [1, 1]} : vector<8x128xf32> to vector<1x32xf32>
    %cst_34 = arith.constant dense<0.000000e+00> : vector<16xf32>
    %123 = vector.multi_reduction <add>, %120, %cst_34 [1] : vector<16x32xf32> to vector<16xf32>
    %124 = vector.shape_cast %123 : vector<16xf32> to vector<16x1xf32>
    %cst_35 = arith.constant 3.200000e+01 : f32
    %125 = vector.broadcast %cst_35 : f32 to vector<16x1xf32>
    %126 = arith.divf %124, %125 : vector<16x1xf32>
    %127 = vector.broadcast %126 : vector<16x1xf32> to vector<16x32xf32>
    %128 = arith.subf %120, %127 : vector<16x32xf32>
    %129 = arith.mulf %128, %128 : vector<16x32xf32>
    %cst_36 = arith.constant dense<0.000000e+00> : vector<16xf32>
    %130 = vector.multi_reduction <add>, %129, %cst_36 [1] : vector<16x32xf32> to vector<16xf32>
    %131 = vector.shape_cast %130 : vector<16xf32> to vector<16x1xf32>
    %cst_37 = arith.constant 3.200000e+01 : f32
    %132 = vector.broadcast %cst_37 : f32 to vector<16x1xf32>
    %133 = arith.divf %131, %132 : vector<16x1xf32>
    %cst_38 = arith.constant 9.99999996E-13 : f32
    %134 = vector.broadcast %cst_38 : f32 to vector<16x1xf32>
    %135 = arith.addf %133, %134 : vector<16x1xf32>
    %136 = math.rsqrt %135 : vector<16x1xf32>
    %137 = vector.broadcast %136 : vector<16x1xf32> to vector<16x32xf32>
    %138 = arith.mulf %128, %137 : vector<16x32xf32>
    %139 = vector.broadcast %121 : vector<1x32xf32> to vector<16x32xf32>
    %140 = arith.mulf %138, %139 : vector<16x32xf32>
    %141 = vector.broadcast %122 : vector<1x32xf32> to vector<16x32xf32>
    %142 = arith.addf %140, %141 : vector<16x32xf32>
    %c1 = arith.constant 1 : index
    %c0_39 = arith.constant 0 : index
    %c0_40 = arith.constant 0 : index
    %143 = vector.load %arg2[%c1, %c0_39, %c0_40] : memref<3x32x256xbf16, #tpu.memory_space<vmem>>, vector<1x32x256xbf16>
    %144 = vector.shape_cast %143 : vector<1x32x256xbf16> to vector<32x256xbf16>
    %c1_41 = arith.constant 1 : index
    %c0_42 = arith.constant 0 : index
    %c0_43 = arith.constant 0 : index
    %145 = vector.load %arg3[%c1_41, %c0_42, %c0_43] : memref<3x8x128xf32, #tpu.memory_space<vmem>>, vector<1x8x128xf32>
    %146 = vector.shape_cast %145 : vector<1x8x128xf32> to vector<8x128xf32>
    %147 = vector.extract_strided_slice %144 {offsets = [0, 0], sizes = [32, 96], strides = [1, 1]} : vector<32x256xbf16> to vector<32x96xbf16>
    %148 = vector.extract_strided_slice %144 {offsets = [0, 96], sizes = [32, 32], strides = [1, 1]} : vector<32x256xbf16> to vector<32x32xbf16>
    %149 = vector.extract_strided_slice %144 {offsets = [0, 128], sizes = [32, 64], strides = [1, 1]} : vector<32x256xbf16> to vector<32x64xbf16>
    %150 = vector.extract_strided_slice %144 {offsets = [0, 192], sizes = [32, 64], strides = [1, 1]} : vector<32x256xbf16> to vector<32x64xbf16>
    %151 = arith.truncf %142 : vector<16x32xf32> to vector<16x32xbf16>
    %152 = vector.extract_strided_slice %146 {offsets = [0, 0], sizes = [1, 96], strides = [1, 1]} : vector<8x128xf32> to vector<1x96xf32>
    %cst_44 = arith.constant dense<0.000000e+00> : vector<16x96xf32>
    %153 = tpu.matmul %151, %147, %cst_44 {dimension_numbers = #tpu.dot_dimension_numbers<[1], [0], [0], [1], [0, 0, 1, 1], [], []>} : vector<16x32xbf16>, vector<32x96xbf16>, vector<16x96xf32> -> vector<16x96xf32>
    %154 = vector.broadcast %152 : vector<1x96xf32> to vector<16x96xf32>
    %155 = arith.addf %153, %154 : vector<16x96xf32>
    %156 = arith.truncf %155 : vector<16x96xf32> to vector<16x96xbf16>
    %157 = vector.extract_strided_slice %156 {offsets = [0, 0], sizes = [16, 48], strides = [1, 1]} : vector<16x96xbf16> to vector<16x48xbf16>
    %158 = vector.extract_strided_slice %156 {offsets = [0, 48], sizes = [16, 48], strides = [1, 1]} : vector<16x96xbf16> to vector<16x48xbf16>
    %159 = vector.shape_cast %157 : vector<16x48xbf16> to vector<1x16x48xbf16>
    %160 = vector.shape_cast %158 : vector<16x48xbf16> to vector<1x16x48xbf16>
    %161 = tpu.concatenate %159, %160 in 0 : vector<1x16x48xbf16>, vector<1x16x48xbf16> -> vector<2x16x48xbf16>
    %162 = vector.extract_strided_slice %161 {offsets = [0, 0, 0], sizes = [2, 16, 16], strides = [1, 1, 1]} : vector<2x16x48xbf16> to vector<2x16x16xbf16>
    %163 = vector.extract_strided_slice %161 {offsets = [0, 0, 16], sizes = [2, 16, 16], strides = [1, 1, 1]} : vector<2x16x48xbf16> to vector<2x16x16xbf16>
    %164 = vector.extract_strided_slice %161 {offsets = [0, 0, 32], sizes = [2, 16, 16], strides = [1, 1, 1]} : vector<2x16x48xbf16> to vector<2x16x16xbf16>
    %cst_45 = arith.constant dense<0.000000e+00> : vector<2x16x16xf32>
    %165 = tpu.matmul %162, %163, %cst_45 {dimension_numbers = #tpu.dot_dimension_numbers<[2], [2], [1], [1], [0, 0, 0, 1, 1, 1], [0], [0]>} : vector<2x16x16xbf16>, vector<2x16x16xbf16>, vector<2x16x16xf32> -> vector<2x16x16xf32>
    %cst_46 = arith.constant 2.500000e-01 : f32
    %166 = vector.broadcast %cst_46 : f32 to vector<2x16x16xf32>
    %167 = arith.mulf %165, %166 : vector<2x16x16xf32>
    %168 = arith.addf %167, %0 : vector<2x16x16xf32>
    %cst_47 = arith.constant dense<0xFF800000> : vector<2x16xf32>
    %169 = vector.multi_reduction <maximumf>, %168, %cst_47 [2] : vector<2x16x16xf32> to vector<2x16xf32>
    %170 = vector.shape_cast %169 : vector<2x16xf32> to vector<2x16x1xf32>
    %171 = vector.broadcast %170 : vector<2x16x1xf32> to vector<2x16x16xf32>
    %172 = arith.subf %168, %171 : vector<2x16x16xf32>
    %173 = math.exp %172 : vector<2x16x16xf32>
    %cst_48 = arith.constant dense<0.000000e+00> : vector<2x16xf32>
    %174 = vector.multi_reduction <add>, %173, %cst_48 [2] : vector<2x16x16xf32> to vector<2x16xf32>
    %175 = vector.shape_cast %174 : vector<2x16xf32> to vector<2x16x1xf32>
    %176 = tpu.reciprocal %175 {approx = true} : vector<2x16x1xf32> -> vector<2x16x1xf32>
    %177 = vector.broadcast %176 : vector<2x16x1xf32> to vector<2x16x16xf32>
    %178 = arith.mulf %173, %177 : vector<2x16x16xf32>
    %179 = arith.truncf %178 : vector<2x16x16xf32> to vector<2x16x16xbf16>
    %cst_49 = arith.constant dense<0.000000e+00> : vector<2x16x16xf32>
    %180 = tpu.matmul %179, %164, %cst_49 {dimension_numbers = #tpu.dot_dimension_numbers<[2], [1], [1], [2], [0, 0, 0, 1, 1, 2], [0], [0]>} : vector<2x16x16xbf16>, vector<2x16x16xbf16>, vector<2x16x16xf32> -> vector<2x16x16xf32>
    %181 = vector.extract_strided_slice %180 {offsets = [0, 0, 0], sizes = [1, 16, 16], strides = [1, 1, 1]} : vector<2x16x16xf32> to vector<1x16x16xf32>
    %182 = vector.shape_cast %181 : vector<1x16x16xf32> to vector<16x16xf32>
    %183 = vector.extract_strided_slice %180 {offsets = [1, 0, 0], sizes = [1, 16, 16], strides = [1, 1, 1]} : vector<2x16x16xf32> to vector<1x16x16xf32>
    %184 = vector.shape_cast %183 : vector<1x16x16xf32> to vector<16x16xf32>
    %185 = tpu.concatenate %182, %184 in 1 : vector<16x16xf32>, vector<16x16xf32> -> vector<16x32xf32>
    %186 = arith.truncf %185 : vector<16x32xf32> to vector<16x32xbf16>
    %187 = vector.extract_strided_slice %146 {offsets = [1, 0], sizes = [1, 32], strides = [1, 1]} : vector<8x128xf32> to vector<1x32xf32>
    %cst_50 = arith.constant dense<0.000000e+00> : vector<16x32xf32>
    %188 = tpu.matmul %186, %148, %cst_50 {dimension_numbers = #tpu.dot_dimension_numbers<[1], [0], [0], [1], [0, 0, 1, 1], [], []>} : vector<16x32xbf16>, vector<32x32xbf16>, vector<16x32xf32> -> vector<16x32xf32>
    %189 = vector.broadcast %187 : vector<1x32xf32> to vector<16x32xf32>
    %190 = arith.addf %188, %189 : vector<16x32xf32>
    %191 = arith.addf %190, %142 : vector<16x32xf32>
    %192 = vector.extract_strided_slice %146 {offsets = [2, 0], sizes = [1, 32], strides = [1, 1]} : vector<8x128xf32> to vector<1x32xf32>
    %193 = vector.extract_strided_slice %146 {offsets = [3, 0], sizes = [1, 32], strides = [1, 1]} : vector<8x128xf32> to vector<1x32xf32>
    %cst_51 = arith.constant dense<0.000000e+00> : vector<16xf32>
    %194 = vector.multi_reduction <add>, %191, %cst_51 [1] : vector<16x32xf32> to vector<16xf32>
    %195 = vector.shape_cast %194 : vector<16xf32> to vector<16x1xf32>
    %cst_52 = arith.constant 3.200000e+01 : f32
    %196 = vector.broadcast %cst_52 : f32 to vector<16x1xf32>
    %197 = arith.divf %195, %196 : vector<16x1xf32>
    %198 = vector.broadcast %197 : vector<16x1xf32> to vector<16x32xf32>
    %199 = arith.subf %191, %198 : vector<16x32xf32>
    %200 = arith.mulf %199, %199 : vector<16x32xf32>
    %cst_53 = arith.constant dense<0.000000e+00> : vector<16xf32>
    %201 = vector.multi_reduction <add>, %200, %cst_53 [1] : vector<16x32xf32> to vector<16xf32>
    %202 = vector.shape_cast %201 : vector<16xf32> to vector<16x1xf32>
    %cst_54 = arith.constant 3.200000e+01 : f32
    %203 = vector.broadcast %cst_54 : f32 to vector<16x1xf32>
    %204 = arith.divf %202, %203 : vector<16x1xf32>
    %cst_55 = arith.constant 9.99999996E-13 : f32
    %205 = vector.broadcast %cst_55 : f32 to vector<16x1xf32>
    %206 = arith.addf %204, %205 : vector<16x1xf32>
    %207 = math.rsqrt %206 : vector<16x1xf32>
    %208 = vector.broadcast %207 : vector<16x1xf32> to vector<16x32xf32>
    %209 = arith.mulf %199, %208 : vector<16x32xf32>
    %210 = vector.broadcast %192 : vector<1x32xf32> to vector<16x32xf32>
    %211 = arith.mulf %209, %210 : vector<16x32xf32>
    %212 = vector.broadcast %193 : vector<1x32xf32> to vector<16x32xf32>
    %213 = arith.addf %211, %212 : vector<16x32xf32>
    %214 = arith.truncf %213 : vector<16x32xf32> to vector<16x32xbf16>
    %215 = vector.extract_strided_slice %146 {offsets = [4, 0], sizes = [1, 64], strides = [1, 1]} : vector<8x128xf32> to vector<1x64xf32>
    %cst_56 = arith.constant dense<0.000000e+00> : vector<16x64xf32>
    %216 = tpu.matmul %214, %149, %cst_56 {dimension_numbers = #tpu.dot_dimension_numbers<[1], [0], [0], [1], [0, 0, 1, 1], [], []>} : vector<16x32xbf16>, vector<32x64xbf16>, vector<16x64xf32> -> vector<16x64xf32>
    %217 = vector.broadcast %215 : vector<1x64xf32> to vector<16x64xf32>
    %218 = arith.addf %216, %217 : vector<16x64xf32>
    %cst_57 = arith.constant 5.000000e-01 : f32
    %219 = vector.broadcast %cst_57 : f32 to vector<16x64xf32>
    %220 = arith.mulf %219, %218 : vector<16x64xf32>
    %cst_58 = arith.constant 4.471500e-02 : f32
    %221 = vector.broadcast %cst_58 : f32 to vector<16x64xf32>
    %222 = arith.mulf %221, %218 : vector<16x64xf32>
    %223 = arith.mulf %222, %218 : vector<16x64xf32>
    %224 = arith.mulf %223, %218 : vector<16x64xf32>
    %225 = arith.addf %218, %224 : vector<16x64xf32>
    %cst_59 = arith.constant 0.797884583 : f32
    %226 = vector.broadcast %cst_59 : f32 to vector<16x64xf32>
    %227 = arith.mulf %226, %225 : vector<16x64xf32>
    %228 = math.tanh %227 : vector<16x64xf32>
    %cst_60 = arith.constant 1.000000e+00 : f32
    %229 = vector.broadcast %cst_60 : f32 to vector<16x64xf32>
    %230 = arith.addf %229, %228 : vector<16x64xf32>
    %231 = arith.mulf %220, %230 : vector<16x64xf32>
    %232 = arith.truncf %231 : vector<16x64xf32> to vector<16x64xbf16>
    %cst_61 = arith.constant dense<0.000000e+00> : vector<16x32xf32>
    %233 = tpu.matmul %232, %150, %cst_61 {dimension_numbers = #tpu.dot_dimension_numbers<[1], [1], [0], [0], [0, 0, 1, 0], [], []>} : vector<16x64xbf16>, vector<32x64xbf16>, vector<16x32xf32> -> vector<16x32xf32>
    %234 = vector.extract_strided_slice %146 {offsets = [5, 0], sizes = [1, 32], strides = [1, 1]} : vector<8x128xf32> to vector<1x32xf32>
    %235 = vector.broadcast %234 : vector<1x32xf32> to vector<16x32xf32>
    %236 = arith.addf %233, %235 : vector<16x32xf32>
    %237 = arith.addf %236, %213 : vector<16x32xf32>
    %238 = vector.extract_strided_slice %146 {offsets = [6, 0], sizes = [1, 32], strides = [1, 1]} : vector<8x128xf32> to vector<1x32xf32>
    %239 = vector.extract_strided_slice %146 {offsets = [7, 0], sizes = [1, 32], strides = [1, 1]} : vector<8x128xf32> to vector<1x32xf32>
    %cst_62 = arith.constant dense<0.000000e+00> : vector<16xf32>
    %240 = vector.multi_reduction <add>, %237, %cst_62 [1] : vector<16x32xf32> to vector<16xf32>
    %241 = vector.shape_cast %240 : vector<16xf32> to vector<16x1xf32>
    %cst_63 = arith.constant 3.200000e+01 : f32
    %242 = vector.broadcast %cst_63 : f32 to vector<16x1xf32>
    %243 = arith.divf %241, %242 : vector<16x1xf32>
    %244 = vector.broadcast %243 : vector<16x1xf32> to vector<16x32xf32>
    %245 = arith.subf %237, %244 : vector<16x32xf32>
    %246 = arith.mulf %245, %245 : vector<16x32xf32>
    %cst_64 = arith.constant dense<0.000000e+00> : vector<16xf32>
    %247 = vector.multi_reduction <add>, %246, %cst_64 [1] : vector<16x32xf32> to vector<16xf32>
    %248 = vector.shape_cast %247 : vector<16xf32> to vector<16x1xf32>
    %cst_65 = arith.constant 3.200000e+01 : f32
    %249 = vector.broadcast %cst_65 : f32 to vector<16x1xf32>
    %250 = arith.divf %248, %249 : vector<16x1xf32>
    %cst_66 = arith.constant 9.99999996E-13 : f32
    %251 = vector.broadcast %cst_66 : f32 to vector<16x1xf32>
    %252 = arith.addf %250, %251 : vector<16x1xf32>
    %253 = math.rsqrt %252 : vector<16x1xf32>
    %254 = vector.broadcast %253 : vector<16x1xf32> to vector<16x32xf32>
    %255 = arith.mulf %245, %254 : vector<16x32xf32>
    %256 = vector.broadcast %238 : vector<1x32xf32> to vector<16x32xf32>
    %257 = arith.mulf %255, %256 : vector<16x32xf32>
    %258 = vector.broadcast %239 : vector<1x32xf32> to vector<16x32xf32>
    %259 = arith.addf %257, %258 : vector<16x32xf32>
    %c2_67 = arith.constant 2 : index
    %c0_68 = arith.constant 0 : index
    %c0_69 = arith.constant 0 : index
    %260 = vector.load %arg2[%c2_67, %c0_68, %c0_69] : memref<3x32x256xbf16, #tpu.memory_space<vmem>>, vector<1x32x256xbf16>
    %261 = vector.shape_cast %260 : vector<1x32x256xbf16> to vector<32x256xbf16>
    %262 = arith.truncf %259 : vector<16x32xf32> to vector<16x32xbf16>
    %263 = vector.extract_strided_slice %261 {offsets = [0, 0], sizes = [32, 32], strides = [1, 1]} : vector<32x256xbf16> to vector<32x32xbf16>
    %264 = vector.extract_strided_slice %2 {offsets = [2, 0], sizes = [1, 32], strides = [1, 1]} : vector<8x128xf32> to vector<1x32xf32>
    %cst_70 = arith.constant dense<0.000000e+00> : vector<16x32xf32>
    %265 = tpu.matmul %262, %263, %cst_70 {dimension_numbers = #tpu.dot_dimension_numbers<[1], [0], [0], [1], [0, 0, 1, 1], [], []>} : vector<16x32xbf16>, vector<32x32xbf16>, vector<16x32xf32> -> vector<16x32xf32>
    %266 = vector.broadcast %264 : vector<1x32xf32> to vector<16x32xf32>
    %267 = arith.addf %265, %266 : vector<16x32xf32>
    %268 = math.tanh %267 : vector<16x32xf32>
    %269 = arith.truncf %268 : vector<16x32xf32> to vector<16x32xbf16>
    %270 = vector.extract_strided_slice %261 {offsets = [0, 32], sizes = [32, 5], strides = [1, 1]} : vector<32x256xbf16> to vector<32x5xbf16>
    %271 = vector.extract_strided_slice %2 {offsets = [3, 0], sizes = [1, 5], strides = [1, 1]} : vector<8x128xf32> to vector<1x5xf32>
    %cst_71 = arith.constant dense<0.000000e+00> : vector<16x5xf32>
    %272 = tpu.matmul %269, %270, %cst_71 {dimension_numbers = #tpu.dot_dimension_numbers<[1], [0], [0], [1], [0, 0, 1, 1], [], []>} : vector<16x32xbf16>, vector<32x5xbf16>, vector<16x5xf32> -> vector<16x5xf32>
    %273 = vector.broadcast %271 : vector<1x5xf32> to vector<16x5xf32>
    %274 = arith.addf %272, %273 : vector<16x5xf32>
    %c0_72 = arith.constant 0 : index
    %c0_73 = arith.constant 0 : index
    %275 = vector.load %arg4[%c0_72, %c0_73] : memref<16x5xf32, #tpu.memory_space<vmem>>, vector<16x5xf32>
    tpu.vector_store %arg4[%c0_72, %c0_73], %274 {strides = array<i32>} : memref<16x5xf32, #tpu.memory_space<vmem>>, vector<16x5xf32>,
    return
  }
}

</mosaic_0001>

<llo_original>
// kernel: misinformation_forward.1
$region0: #{misinformation_forward.1}
  #allocation0 [shape = 'u32[]', space=smem, size = 0x4, offset = 0x4, fixed_abs, tag = 'smem constant byte address 0x4 - core index']
  #allocation1 [shape = 'u32[144,128]{1,0:T(1,128)}', space=vmem, size = 0x12000, scoped, tag = 'internal scratch']
  %s0 = inlined_call_operand.vmem [shape: f32[16,32], index: 0, kind: input, shape index: {}]
  %s1 = inlined_call_operand.vmem [shape: f32[2,16,16], index: 1, kind: input, shape index: {}]
  %s2 = inlined_call_operand.vmem [shape: bf16[3,32,256], index: 2, kind: input, shape index: {}]
  %s3 = inlined_call_operand.vmem [shape: f32[3,8,128], index: 3, kind: input, shape index: {}]
  %s4 = inlined_call_operand.vmem [shape: f32[16,5], index: 4, kind: output, shape index: {}]
  %s5 = sld [smem:[#allocation0]]
  $region26: #{misinformation_forward.1} parent=0
    _
  %s7 = ssub.s32 1, %s5
  %s8 = scalar_select 0, %s7, %s5
  // Predicated region
  $region2: #{misinformation_forward.1} parent=0 // pred_check
    _
  $region3: #{misinformation_forward.1} parent=0 // pred_check_branch
    %10 = sbr.rel (0) target = $region5
  $region4: #{misinformation_forward.1} parent=0 // pred_region
    _
  $region5: #{misinformation_forward.1} parent=0 // pred_fallthru
    _
  // Predicated region
  $region6: #{misinformation_forward.1} parent=0 // pred_check
    _
  $region7: #{misinformation_forward.1} parent=0 // pred_check_branch
    %12 = sbr.rel (0) target = $region9
  $region8: #{misinformation_forward.1} parent=0 // pred_region
    _
  $region9: #{misinformation_forward.1} parent=0 // pred_fallthru
    _
  // Predicated region
  $region10: #{misinformation_forward.1} parent=0 // pred_check
    _
  $region11: #{misinformation_forward.1} parent=0 // pred_check_branch
    %14 = sbr.rel (0) target = $region13
  $region12: #{misinformation_forward.1} parent=0 // pred_region
    _
  $region13: #{misinformation_forward.1} parent=0 // pred_fallthru
    _
  // Predicated region
  $region14: #{misinformation_forward.1} parent=0 // pred_check
    _
  $region15: #{misinformation_forward.1} parent=0 // pred_check_branch
    %16 = sbr.rel (0) target = $region17
  $region16: #{misinformation_forward.1} parent=0 // pred_region
    _
  $region17: #{misinformation_forward.1} parent=0 // pred_fallthru
    _
  %v18 = vld [vmem:[%s1] sm:$0xff]
  %v19 = vld [vmem:[%s1 + $0x8] sm:$0xff]
  %v20 = vld [vmem:[%s1 + $0x10] sm:$0xff]
  %v21 = vld [vmem:[%s1 + $0x18] sm:$0xff]
  %s22 = scalar_lea.vmem %s3, 16
  %v23 = vld [vmem:[%s22] sm:$0xff]
  %v24 = vld [vmem:[%s0] sm:$0xff]
  %v25 = vld [vmem:[%s0 + $0x8] sm:$0xff]
  %vm26 = vcmask 261120
  %v27 = vsel %vm26, %v24, 0.0
  %28 = vadd.xlane.f32.xlu0 %v27
  %v29 = vpop.xlane.xlu0 %28
  %v30 = vsel %vm26, %v25, 0.0
  %31 = vadd.xlane.f32.xlu0 %v30
  %v32 = vpop.xlane.xlu0 %31
  %v33 = vrcp.pop 32.0
  %v34 = vmul.f32 %v29, %v33
  %v35 = vmul.f32 %v32, %v33
  %v36 = vsub.f32 %v24, %v34
  %v37 = vsub.f32 %v25, %v35
  %v38 = vmul.f32 %v36, %v36
  %v39 = vmul.f32 %v37, %v37
  %v40 = vsel %vm26, %v38, 0.0
  %41 = vadd.xlane.f32.xlu0 %v40
  %v42 = vpop.xlane.xlu0 %41
  %v43 = vsel %vm26, %v39, 0.0
  %44 = vadd.xlane.f32.xlu0 %v43
  %v45 = vpop.xlane.xlu0 %44
  %v46 = vmul.f32 %v42, %v33
  %v47 = vmul.f32 %v45, %v33
  %v48 = vadd.f32 %v46, 1e-12
  %v49 = vadd.f32 %v47, 1e-12
  %v50 = vrsqrt.pop %v48
  %v51 = vrsqrt.pop %v49
  %v52 = vmul.f32 %v36, %v50
  %v53 = vmul.f32 %v37, %v51
  %v54 = vlaneseq
  %v55 = vshrl.u32 %v54, 7
  %v56 = vsub.s32 0, %v55
  %v57 = vrot.slane %v23, %v56
  %v58 = vmul.f32 %v52, %v57
  %v59 = vmul.f32 %v53, %v57
  %v60 = vlaneseq
  %v61 = vshrl.u32 %v60, 7
  %v62 = vsub.s32 1, %v61
  %v63 = vrot.slane %v23, %v62
  %v64 = vadd.f32 %v58, %v63
  %v65 = vadd.f32 %v59, %v63
  %v66 = vld [vmem:[%s2] sm:$0xff]
  %v67 = vld [vmem:[%s2 + $0x8] sm:$0xff]
  %v68 = vld [vmem:[%s2 + $0x10] sm:$0xff]
  %v69 = vld [vmem:[%s2 + $0x18] sm:$0xff]
  %v70 = vld [vmem:[%s3] sm:$0xff]
  %v71 = vpack.c.bf16 %v65, %v64
  %v72 = vlaneseq
  %v73 = vshrl.u32 %v72, 7
  %v74 = vsub.s32 0, %v73
  %v75 = vrot.slane %v70, %v74
  %v80 = vunpack.c.l.b16 %v66
  %v81 = vunpack.c.l.b16 %v67
  %v82 = vunpack.c.l.b16 %v68
  %v83 = vunpack.c.l.b16 %v69
  %v84 = vpack.c.b16 %v81, %v80
  %v85 = vpack.c.b16 %v83, %v82
  %v89 = vsel %vm26, %v71, 0
  %91 = vmatprep.subr.bf16.mxu0 0
  %92 = vmatpush1.bf16.msra.mxu0 0
  %93 = vmatprep.subr.bf16.mxu0 0
  %94 = vmatpush1.bf16.msra.mxu0 0
  %95 = vmatprep.subr.bf16.mxu0 0
  %96 = vmatpush1.bf16.msra.mxu0 0
  %97 = vmatprep.subr.bf16.mxu0 0
  %98 = vmatpush1.bf16.msra.mxu0 0
  %99 = vmatprep.subr.bf16.mxu0 0
  %100 = vmatpush1.bf16.msra.mxu0 0
  %101 = vmatprep.subr.bf16.mxu0 0
  %102 = vmatpush1.bf16.msra.mxu0 0
  %103 = vmatprep.subr.bf16.mxu0 0
  %104 = vmatpush1.bf16.msra.mxu0 %v85
  %105 = vmatprep.subr.bf16.mxu0 0
  %106 = vmatpush1.bf16.msra.mxu0 %v84
  %107 = vmatprep.subr.bf16.mxu0 0
  %108 = vmatpush2.bf16.msra.mxu0 0
  %109 = vmatprep.subr.bf16.mxu0 0
  %110 = vmatpush2.bf16.msra.mxu0 0
  %111 = vmatprep.subr.bf16.mxu0 0
  %112 = vmatpush2.bf16.msra.mxu0 0
  %113 = vmatprep.subr.bf16.mxu0 0
  %114 = vmatpush2.bf16.msra.mxu0 0
  %115 = vmatprep.subr.bf16.mxu0 0
  %116 = vmatpush2.bf16.msra.mxu0 0
  %117 = vmatprep.subr.bf16.mxu0 0
  %118 = vmatpush2.bf16.msra.mxu0 0
  %119 = vmatprep.subr.bf16.mxu0 0
  %120 = vmatpush2.bf16.msra.mxu0 0
  %121 = vmatprep.subr.bf16.mxu0 0
  %122 = vmatpush2.bf16.msra.mxu0 0
  %123 = vmatprep.mubr.bf16.mxu0 0
  %124 = vmatmul.mubr.bf16.gmra.mxu0 %v89
  %v125 = vpop.f32.mrf.mxu0
  %v126 = vadd.f32 %v75, %v125
  %v127 = vpop.f32.mrf.mxu0
  %v128 = vpop.f32.mrf.mxu0
  %v129 = vadd.f32 %v75, %v128
  %v130 = vpop.f32.mrf.mxu0
  %131 = vdwg.mxu0
  %v132 = vpack.c.bf16 %v129, %v126
  %134 = vrot.lane.b32.xlu0 %v132, 80
  %v135 = vpop.permute.xlu0 %134
  %136 = vrot.lane.b32.xlu0 %v132, 112
  %v137 = vpop.permute.xlu0 %136
  %vm138 = vcmask 130048
  %v140 = vsel %vm138, %v132, 0
  %v143 = vsel %vm138, %v137, 0
  %145 = vmatprep.subr.bf16.mxu0 0
  %146 = vmatpush1.bf16.xpose.msra.mxu0 0
  %147 = vmatprep.subr.bf16.mxu0 0
  %148 = vmatpush1.bf16.xpose.msra.mxu0 0
  %149 = vmatprep.subr.bf16.mxu0 0
  %150 = vmatpush1.bf16.xpose.msra.mxu0 0
  %151 = vmatprep.subr.bf16.mxu0 0
  %152 = vmatpush1.bf16.xpose.msra.mxu0 0
  %153 = vmatprep.subr.bf16.mxu0 0
  %154 = vmatpush1.bf16.xpose.msra.mxu0 0
  %155 = vmatprep.subr.bf16.mxu0 0
  %156 = vmatpush1.bf16.xpose.msra.mxu0 0
  %157 = vmatprep.subr.bf16.mxu0 0
  %158 = vmatpush1.bf16.xpose.msra.mxu0 0
  %159 = vmatprep.subr.bf16.mxu0 0
  %160 = vmatpush1.bf16.xpose.msra.mxu0 %v143
  %161 = vmatprep.subr.bf16.mxu0 0
  %162 = vmatpush2.bf16.xpose.msra.mxu0 0
  %163 = vmatprep.subr.bf16.mxu0 0
  %164 = vmatpush2.bf16.xpose.msra.mxu0 0
  %165 = vmatprep.subr.bf16.mxu0 0
  %166 = vmatpush2.bf16.xpose.msra.mxu0 0
  %167 = vmatprep.subr.bf16.mxu0 0
  %168 = vmatpush2.bf16.xpose.msra.mxu0 0
  %169 = vmatprep.subr.bf16.mxu0 0
  %170 = vmatpush2.bf16.xpose.msra.mxu0 0
  %171 = vmatprep.subr.bf16.mxu0 0
  %172 = vmatpush2.bf16.xpose.msra.mxu0 0
  %173 = vmatprep.subr.bf16.mxu0 0
  %174 = vmatpush2.bf16.xpose.msra.mxu0 0
  %175 = vmatprep.subr.bf16.mxu0 0
  %176 = vmatpush2.bf16.xpose.msra.mxu0 0
  %177 = vmatprep.mubr.bf16.mxu0 0
  %178 = vmatmul.mubr.bf16.gmra.mxu0 %v140
  %v179 = vpop.f32.mrf.mxu0
  %v180 = vadd.f32 0.0, %v179
  %v181 = vpop.f32.mrf.mxu0
  %v182 = vpop.f32.mrf.mxu0
  %v183 = vadd.f32 0.0, %v182
  %v184 = vpop.f32.mrf.mxu0
  %185 = vdwg.mxu0
  %186 = vrot.lane.b32.xlu0 %v135, 112
  %v187 = vpop.permute.xlu0 %186
  %v189 = vsel %vm138, %v135, 0
  %v192 = vsel %vm138, %v187, 0
  %194 = vmatprep.subr.bf16.mxu0 0
  %195 = vmatpush1.bf16.xpose.msra.mxu0 0
  %196 = vmatprep.subr.bf16.mxu0 0
  %197 = vmatpush1.bf16.xpose.msra.mxu0 0
  %198 = vmatprep.subr.bf16.mxu0 0
  %199 = vmatpush1.bf16.xpose.msra.mxu0 0
  %200 = vmatprep.subr.bf16.mxu0 0
  %201 = vmatpush1.bf16.xpose.msra.mxu0 0
  %202 = vmatprep.subr.bf16.mxu0 0
  %203 = vmatpush1.bf16.xpose.msra.mxu0 0
  %204 = vmatprep.subr.bf16.mxu0 0
  %205 = vmatpush1.bf16.xpose.msra.mxu0 0
  %206 = vmatprep.subr.bf16.mxu0 0
  %207 = vmatpush1.bf16.xpose.msra.mxu0 0
  %208 = vmatprep.subr.bf16.mxu0 0
  %209 = vmatpush1.bf16.xpose.msra.mxu0 %v192
  %210 = vmatprep.subr.bf16.mxu0 0
  %211 = vmatpush2.bf16.xpose.msra.mxu0 0
  %212 = vmatprep.subr.bf16.mxu0 0
  %213 = vmatpush2.bf16.xpose.msra.mxu0 0
  %214 = vmatprep.subr.bf16.mxu0 0
  %215 = vmatpush2.bf16.xpose.msra.mxu0 0
  %216 = vmatprep.subr.bf16.mxu0 0
  %217 = vmatpush2.bf16.xpose.msra.mxu0 0
  %218 = vmatprep.subr.bf16.mxu0 0
  %219 = vmatpush2.bf16.xpose.msra.mxu0 0
  %220 = vmatprep.subr.bf16.mxu0 0
  %221 = vmatpush2.bf16.xpose.msra.mxu0 0
  %222 = vmatprep.subr.bf16.mxu0 0
  %223 = vmatpush2.bf16.xpose.msra.mxu0 0
  %224 = vmatprep.subr.bf16.mxu0 0
  %225 = vmatpush2.bf16.xpose.msra.mxu0 0
  %226 = vmatprep.mubr.bf16.mxu0 0
  %227 = vmatmul.mubr.bf16.gmra.mxu0 %v189
  %v228 = vpop.f32.mrf.mxu0
  %v229 = vadd.f32 0.0, %v228
  %v230 = vpop.f32.mrf.mxu0
  %v231 = vpop.f32.mrf.mxu0
  %v232 = vadd.f32 0.0, %v231
  %v233 = vpop.f32.mrf.mxu0
  %234 = vdwg.mxu0
  %v235 = vmul.f32 %v180, 0.25
  %v236 = vmul.f32 %v183, 0.25
  %v237 = vmul.f32 %v229, 0.25
  %v238 = vmul.f32 %v232, 0.25
  %v239 = vadd.f32 %v235, %v18
  %v240 = vadd.f32 %v236, %v19
  %v241 = vadd.f32 %v237, %v20
  %v242 = vadd.f32 %v238, %v21
  %v243 = vsel %vm138, %v239, -inf
  %244 = vmax.xlane.f32.xlu0 %v243
  %v245 = vpop.xlane.xlu0 %244
  %v246 = vsel %vm138, %v240, -inf
  %247 = vmax.xlane.f32.xlu0 %v246
  %v248 = vpop.xlane.xlu0 %247
  %v249 = vsel %vm138, %v241, -inf
  %250 = vmax.xlane.f32.xlu0 %v249
  %v251 = vpop.xlane.xlu0 %250
  %v252 = vsel %vm138, %v242, -inf
  %253 = vmax.xlane.f32.xlu0 %v252
  %v254 = vpop.xlane.xlu0 %253
  %v255 = vsub.f32 %v239, %v245
  %v256 = vsub.f32 %v240, %v248
  %v257 = vsub.f32 %v241, %v251
  %v258 = vsub.f32 %v242, %v254
  %v259 = vmul.f32 %v255, 1.442695
  %v260 = vpow.pop %v259
  %v261 = vmul.f32 %v256, 1.442695
  %v262 = vpow.pop %v261
  %v263 = vmul.f32 %v257, 1.442695
  %v264 = vpow.pop %v263
  %v265 = vmul.f32 %v258, 1.442695
  %v266 = vpow.pop %v265
  %v267 = vsel %vm138, %v260, 0.0
  %268 = vadd.xlane.f32.xlu0 %v267
  %v269 = vpop.xlane.xlu0 %268
  %v270 = vsel %vm138, %v262, 0.0
  %271 = vadd.xlane.f32.xlu0 %v270
  %v272 = vpop.xlane.xlu0 %271
  %v273 = vsel %vm138, %v264, 0.0
  %274 = vadd.xlane.f32.xlu0 %v273
  %v275 = vpop.xlane.xlu0 %274
  %v276 = vsel %vm138, %v266, 0.0
  %277 = vadd.xlane.f32.xlu0 %v276
  %v278 = vpop.xlane.xlu0 %277
  %v279 = vrcp.pop %v269
  %v280 = vrcp.pop %v272
  %v281 = vrcp.pop %v275
  %v282 = vrcp.pop %v278
  %v283 = vmul.f32 %v260, %v279
  %v284 = vmul.f32 %v262, %v280
  %v285 = vmul.f32 %v264, %v281
  %v286 = vmul.f32 %v266, %v282
  %v287 = vpack.c.bf16 %v284, %v283
  %v288 = vpack.c.bf16 %v286, %v285
  %289 = vrot.lane.b32.xlu0 %v132, 96
  %v290 = vpop.permute.xlu0 %289
  %v293 = vsel %vm138, %v287, 0
  %295 = vmatprep.subr.bf16.mxu0 0
  %296 = vmatpush1.bf16.msra.mxu0 0
  %297 = vmatprep.subr.bf16.mxu0 0
  %298 = vmatpush1.bf16.msra.mxu0 0
  %299 = vmatprep.subr.bf16.mxu0 0
  %300 = vmatpush1.bf16.msra.mxu0 0
  %301 = vmatprep.subr.bf16.mxu0 0
  %302 = vmatpush1.bf16.msra.mxu0 0
  %303 = vmatprep.subr.bf16.mxu0 0
  %304 = vmatpush1.bf16.msra.mxu0 0
  %305 = vmatprep.subr.bf16.mxu0 0
  %306 = vmatpush1.bf16.msra.mxu0 0
  %307 = vmatprep.subr.bf16.mxu0 0
  %308 = vmatpush1.bf16.msra.mxu0 0
  %309 = vmatprep.subr.bf16.mxu0 0
  %310 = vmatpush1.bf16.msra.mxu0 %v290
  %311 = vmatprep.subr.bf16.mxu0 0
  %312 = vmatpush2.bf16.msra.mxu0 0
  %313 = vmatprep.subr.bf16.mxu0 0
  %314 = vmatpush2.bf16.msra.mxu0 0
  %315 = vmatprep.subr.bf16.mxu0 0
  %316 = vmatpush2.bf16.msra.mxu0 0
  %317 = vmatprep.subr.bf16.mxu0 0
  %318 = vmatpush2.bf16.msra.mxu0 0
  %319 = vmatprep.subr.bf16.mxu0 0
  %320 = vmatpush2.bf16.msra.mxu0 0
  %321 = vmatprep.subr.bf16.mxu0 0
  %322 = vmatpush2.bf16.msra.mxu0 0
  %323 = vmatprep.subr.bf16.mxu0 0
  %324 = vmatpush2.bf16.msra.mxu0 0
  %325 = vmatprep.subr.bf16.mxu0 0
  %326 = vmatpush2.bf16.msra.mxu0 0
  %327 = vmatprep.mubr.bf16.mxu0 0
  %328 = vmatmul.mubr.bf16.gmra.mxu0 %v293
  %v329 = vpop.f32.mrf.mxu0
  %v330 = vadd.f32 0.0, %v329
  %v331 = vpop.f32.mrf.mxu0
  %v332 = vpop.f32.mrf.mxu0
  %v333 = vadd.f32 0.0, %v332
  %v334 = vpop.f32.mrf.mxu0
  %335 = vdwg.mxu0
  %336 = vrot.lane.b32.xlu0 %v135, 96
  %v337 = vpop.permute.xlu0 %336
  %v340 = vsel %vm138, %v288, 0
  %342 = vmatprep.subr.bf16.mxu0 0
  %343 = vmatpush1.bf16.msra.mxu0 0
  %344 = vmatprep.subr.bf16.mxu0 0
  %345 = vmatpush1.bf16.msra.mxu0 0
  %346 = vmatprep.subr.bf16.mxu0 0
  %347 = vmatpush1.bf16.msra.mxu0 0
  %348 = vmatprep.subr.bf16.mxu0 0
  %349 = vmatpush1.bf16.msra.mxu0 0
  %350 = vmatprep.subr.bf16.mxu0 0
  %351 = vmatpush1.bf16.msra.mxu0 0
  %352 = vmatprep.subr.bf16.mxu0 0
  %353 = vmatpush1.bf16.msra.mxu0 0
  %354 = vmatprep.subr.bf16.mxu0 0
  %355 = vmatpush1.bf16.msra.mxu0 0
  %356 = vmatprep.subr.bf16.mxu0 0
  %357 = vmatpush1.bf16.msra.mxu0 %v337
  %358 = vmatprep.subr.bf16.mxu0 0
  %359 = vmatpush2.bf16.msra.mxu0 0
  %360 = vmatprep.subr.bf16.mxu0 0
  %361 = vmatpush2.bf16.msra.mxu0 0
  %362 = vmatprep.subr.bf16.mxu0 0
  %363 = vmatpush2.bf16.msra.mxu0 0
  %364 = vmatprep.subr.bf16.mxu0 0
  %365 = vmatpush2.bf16.msra.mxu0 0
  %366 = vmatprep.subr.bf16.mxu0 0
  %367 = vmatpush2.bf16.msra.mxu0 0
  %368 = vmatprep.subr.bf16.mxu0 0
  %369 = vmatpush2.bf16.msra.mxu0 0
  %370 = vmatprep.subr.bf16.mxu0 0
  %371 = vmatpush2.bf16.msra.mxu0 0
  %372 = vmatprep.subr.bf16.mxu0 0
  %373 = vmatpush2.bf16.msra.mxu0 0
  %374 = vmatprep.mubr.bf16.mxu0 0
  %375 = vmatmul.mubr.bf16.gmra.mxu0 %v340
  %v376 = vpop.f32.mrf.mxu0
  %v377 = vadd.f32 0.0, %v376
  %v378 = vpop.f32.mrf.mxu0
  %v379 = vpop.f32.mrf.mxu0
  %v380 = vadd.f32 0.0, %v379
  %v381 = vpop.f32.mrf.mxu0
  %382 = vdwg.mxu0
  %385 = vrot.lane.b32.xlu0 %v377, 16
  %v386 = vpop.permute.xlu0 %385
  %387 = vrot.lane.b32.xlu0 %v380, 16
  %v388 = vpop.permute.xlu0 %387
  %v391 = vsel %vm138, %v330, %v386
  %v392 = vsel %vm138, %v333, %v388
  %v393 = vpack.c.bf16 %v392, %v391
  %v394 = vlaneseq
  %v395 = vshrl.u32 %v394, 7
  %v396 = vsub.s32 1, %v395
  %v397 = vrot.slane %v70, %v396
  %398 = vrot.lane.b32.xlu0 %v84, 32
  %v399 = vpop.permute.xlu0 %398
  %400 = vrot.lane.b32.xlu0 %v85, 32
  %v401 = vpop.permute.xlu0 %400
  %v405 = vsel %vm26, %v393, 0
  %407 = vmatprep.subr.bf16.mxu0 0
  %408 = vmatpush1.bf16.msra.mxu0 0
  %409 = vmatprep.subr.bf16.mxu0 0
  %410 = vmatpush1.bf16.msra.mxu0 0
  %411 = vmatprep.subr.bf16.mxu0 0
  %412 = vmatpush1.bf16.msra.mxu0 0
  %413 = vmatprep.subr.bf16.mxu0 0
  %414 = vmatpush1.bf16.msra.mxu0 0
  %415 = vmatprep.subr.bf16.mxu0 0
  %416 = vmatpush1.bf16.msra.mxu0 0
  %417 = vmatprep.subr.bf16.mxu0 0
  %418 = vmatpush1.bf16.msra.mxu0 0
  %419 = vmatprep.subr.bf16.mxu0 0
  %420 = vmatpush1.bf16.msra.mxu0 %v401
  %421 = vmatprep.subr.bf16.mxu0 0
  %422 = vmatpush1.bf16.msra.mxu0 %v399
  %423 = vmatprep.subr.bf16.mxu0 0
  %424 = vmatpush2.bf16.msra.mxu0 0
  %425 = vmatprep.subr.bf16.mxu0 0
  %426 = vmatpush2.bf16.msra.mxu0 0
  %427 = vmatprep.subr.bf16.mxu0 0
  %428 = vmatpush2.bf16.msra.mxu0 0
  %429 = vmatprep.subr.bf16.mxu0 0
  %430 = vmatpush2.bf16.msra.mxu0 0
  %431 = vmatprep.subr.bf16.mxu0 0
  %432 = vmatpush2.bf16.msra.mxu0 0
  %433 = vmatprep.subr.bf16.mxu0 0
  %434 = vmatpush2.bf16.msra.mxu0 0
  %435 = vmatprep.subr.bf16.mxu0 0
  %436 = vmatpush2.bf16.msra.mxu0 0
  %437 = vmatprep.subr.bf16.mxu0 0
  %438 = vmatpush2.bf16.msra.mxu0 0
  %439 = vmatprep.mubr.bf16.mxu0 0
  %440 = vmatmul.mubr.bf16.gmra.mxu0 %v405
  %v441 = vpop.f32.mrf.mxu0
  %v442 = vadd.f32 %v397, %v441
  %v443 = vpop.f32.mrf.mxu0
  %v444 = vpop.f32.mrf.mxu0
  %v445 = vadd.f32 %v397, %v444
  %v446 = vpop.f32.mrf.mxu0
  %447 = vdwg.mxu0
  %v448 = vadd.f32 %v442, %v64
  %v449 = vadd.f32 %v445, %v65
  %v450 = vsel %vm26, %v448, 0.0
  %451 = vadd.xlane.f32.xlu0 %v450
  %v452 = vpop.xlane.xlu0 %451
  %v453 = vsel %vm26, %v449, 0.0
  %454 = vadd.xlane.f32.xlu0 %v453
  %v455 = vpop.xlane.xlu0 %454
  %v456 = vmul.f32 %v452, %v33
  %v457 = vmul.f32 %v455, %v33
  %v458 = vsub.f32 %v448, %v456
  %v459 = vsub.f32 %v449, %v457
  %v460 = vmul.f32 %v458, %v458
  %v461 = vmul.f32 %v459, %v459
  %v462 = vsel %vm26, %v460, 0.0
  %463 = vadd.xlane.f32.xlu0 %v462
  %v464 = vpop.xlane.xlu0 %463
  %v465 = vsel %vm26, %v461, 0.0
  %466 = vadd.xlane.f32.xlu0 %v465
  %v467 = vpop.xlane.xlu0 %466
  %v468 = vmul.f32 %v464, %v33
  %v469 = vmul.f32 %v467, %v33
  %v470 = vadd.f32 %v468, 1e-12
  %v471 = vadd.f32 %v469, 1e-12
  %v472 = vrsqrt.pop %v470
  %v473 = vrsqrt.pop %v471
  %v474 = vmul.f32 %v458, %v472
  %v475 = vmul.f32 %v459, %v473
  %v476 = vlaneseq
  %v477 = vshrl.u32 %v476, 7
  %v478 = vsub.s32 2, %v477
  %v479 = vrot.slane %v70, %v478
  %v480 = vmul.f32 %v474, %v479
  %v481 = vmul.f32 %v475, %v479
  %v482 = vlaneseq
  %v483 = vshrl.u32 %v482, 7
  %v484 = vsub.s32 3, %v483
  %v485 = vrot.slane %v70, %v484
  %v486 = vadd.f32 %v480, %v485
  %v487 = vadd.f32 %v481, %v485
  %v488 = vpack.c.bf16 %v487, %v486
  %v489 = vlaneseq
  %v490 = vshrl.u32 %v489, 7
  %v491 = vsub.s32 4, %v490
  %v492 = vrot.slane %v70, %v491
  %v493 = vunpack.c.h.b16 %v66
  %v494 = vunpack.c.h.b16 %v67
  %v495 = vunpack.c.h.b16 %v68
  %v496 = vunpack.c.h.b16 %v69
  %v497 = vpack.c.b16 %v494, %v493
  %v498 = vpack.c.b16 %v496, %v495
  %v502 = vsel %vm26, %v488, 0
  %504 = vmatprep.subr.bf16.mxu0 0
  %505 = vmatpush1.bf16.msra.mxu0 0
  %506 = vmatprep.subr.bf16.mxu0 0
  %507 = vmatpush1.bf16.msra.mxu0 0
  %508 = vmatprep.subr.bf16.mxu0 0
  %509 = vmatpush1.bf16.msra.mxu0 0
  %510 = vmatprep.subr.bf16.mxu0 0
  %511 = vmatpush1.bf16.msra.mxu0 0
  %512 = vmatprep.subr.bf16.mxu0 0
  %513 = vmatpush1.bf16.msra.mxu0 0
  %514 = vmatprep.subr.bf16.mxu0 0
  %515 = vmatpush1.bf16.msra.mxu0 0
  %516 = vmatprep.subr.bf16.mxu0 0
  %517 = vmatpush1.bf16.msra.mxu0 %v498
  %518 = vmatprep.subr.bf16.mxu0 0
  %519 = vmatpush1.bf16.msra.mxu0 %v497
  %520 = vmatprep.subr.bf16.mxu0 0
  %521 = vmatpush2.bf16.msra.mxu0 0
  %522 = vmatprep.subr.bf16.mxu0 0
  %523 = vmatpush2.bf16.msra.mxu0 0
  %524 = vmatprep.subr.bf16.mxu0 0
  %525 = vmatpush2.bf16.msra.mxu0 0
  %526 = vmatprep.subr.bf16.mxu0 0
  %527 = vmatpush2.bf16.msra.mxu0 0
  %528 = vmatprep.subr.bf16.mxu0 0
  %529 = vmatpush2.bf16.msra.mxu0 0
  %530 = vmatprep.subr.bf16.mxu0 0
  %531 = vmatpush2.bf16.msra.mxu0 0
  %532 = vmatprep.subr.bf16.mxu0 0
  %533 = vmatpush2.bf16.msra.mxu0 0
  %534 = vmatprep.subr.bf16.mxu0 0
  %535 = vmatpush2.bf16.msra.mxu0 0
  %536 = vmatprep.mubr.bf16.mxu0 0
  %537 = vmatmul.mubr.bf16.gmra.mxu0 %v502
  %v538 = vpop.f32.mrf.mxu0
  %v539 = vadd.f32 %v492, %v538
  %v540 = vpop.f32.mrf.mxu0
  %v541 = vpop.f32.mrf.mxu0
  %v542 = vadd.f32 %v492, %v541
  %v543 = vpop.f32.mrf.mxu0
  %544 = vdwg.mxu0
  %v545 = vmul.f32 %v539, 0.5
  %v546 = vmul.f32 %v542, 0.5
  %v547 = vmul.f32 %v539, 0.044715
  %v548 = vmul.f32 %v542, 0.044715
  %v549 = vmul.f32 %v547, %v539
  %v550 = vmul.f32 %v548, %v542
  %v551 = vmul.f32 %v549, %v539
  %v552 = vmul.f32 %v550, %v542
  %v553 = vadd.f32 %v539, %v551
  %v554 = vadd.f32 %v542, %v552
  %v555 = vmul.f32 %v553, 0.7978846
  %v556 = vmul.f32 %v554, 0.7978846
  %v557 = vtanh.pop %v555
  %v558 = vtanh.pop %v556
  %v559 = vadd.f32 %v557, 1.0
  %v560 = vadd.f32 %v558, 1.0
  %v561 = vmul.f32 %v545, %v559
  %v562 = vmul.f32 %v546, %v560
  %v563 = vpack.c.bf16 %v562, %v561
  %v564 = vlaneseq
  %v565 = vshrl.u32 %v564, 7
  %v566 = vsub.s32 5, %v565
  %v567 = vrot.slane %v70, %v566
  %568 = vrot.lane.b32.xlu0 %v497, 64
  %v569 = vpop.permute.xlu0 %568
  %570 = vrot.lane.b32.xlu0 %v498, 64
  %v571 = vpop.permute.xlu0 %570
  %vm572 = vcmask 523264
  %v574 = vsel %vm572, %v563, 0
  %v577 = vsel %vm572, %v569, 0
  %v580 = vsel %vm572, %v571, 0
  %582 = vmatprep.subr.bf16.mxu0 0
  %583 = vmatpush1.bf16.xpose.msra.mxu0 0
  %584 = vmatprep.subr.bf16.mxu0 0
  %585 = vmatpush1.bf16.xpose.msra.mxu0 0
  %586 = vmatprep.subr.bf16.mxu0 0
  %587 = vmatpush1.bf16.xpose.msra.mxu0 0
  %588 = vmatprep.subr.bf16.mxu0 0
  %589 = vmatpush1.bf16.xpose.msra.mxu0 0
  %590 = vmatprep.subr.bf16.mxu0 0
  %591 = vmatpush1.bf16.xpose.msra.mxu0 0
  %592 = vmatprep.subr.bf16.mxu0 0
  %593 = vmatpush1.bf16.xpose.msra.mxu0 0
  %594 = vmatprep.subr.bf16.mxu0 0
  %595 = vmatpush1.bf16.xpose.msra.mxu0 %v580
  %596 = vmatprep.subr.bf16.mxu0 0
  %597 = vmatpush1.bf16.xpose.msra.mxu0 %v577
  %598 = vmatprep.subr.bf16.mxu0 0
  %599 = vmatpush2.bf16.xpose.msra.mxu0 0
  %600 = vmatprep.subr.bf16.mxu0 0
  %601 = vmatpush2.bf16.xpose.msra.mxu0 0
  %602 = vmatprep.subr.bf16.mxu0 0
  %603 = vmatpush2.bf16.xpose.msra.mxu0 0
  %604 = vmatprep.subr.bf16.mxu0 0
  %605 = vmatpush2.bf16.xpose.msra.mxu0 0
  %606 = vmatprep.subr.bf16.mxu0 0
  %607 = vmatpush2.bf16.xpose.msra.mxu0 0
  %608 = vmatprep.subr.bf16.mxu0 0
  %609 = vmatpush2.bf16.xpose.msra.mxu0 0
  %610 = vmatprep.subr.bf16.mxu0 0
  %611 = vmatpush2.bf16.xpose.msra.mxu0 0
  %612 = vmatprep.subr.bf16.mxu0 0
  %613 = vmatpush2.bf16.xpose.msra.mxu0 0
  %614 = vmatprep.mubr.bf16.mxu0 0
  %615 = vmatmul.mubr.bf16.gmra.mxu0 %v574
  %v616 = vpop.f32.mrf.mxu0
  %v617 = vadd.f32 %v567, %v616
  %v618 = vpop.f32.mrf.mxu0
  %v619 = vpop.f32.mrf.mxu0
  %v620 = vadd.f32 %v567, %v619
  %v621 = vpop.f32.mrf.mxu0
  %622 = vdwg.mxu0
  %v623 = vadd.f32 %v617, %v486
  %v624 = vadd.f32 %v620, %v487
  %v625 = vsel %vm26, %v623, 0.0
  %626 = vadd.xlane.f32.xlu0 %v625
  %v627 = vpop.xlane.xlu0 %626
  %v628 = vsel %vm26, %v624, 0.0
  %629 = vadd.xlane.f32.xlu0 %v628
  %v630 = vpop.xlane.xlu0 %629
  %v631 = vmul.f32 %v627, %v33
  %v632 = vmul.f32 %v630, %v33
  %v633 = vsub.f32 %v623, %v631
  %v634 = vsub.f32 %v624, %v632
  %v635 = vmul.f32 %v633, %v633
  %v636 = vmul.f32 %v634, %v634
  %v637 = vsel %vm26, %v635, 0.0
  %638 = vadd.xlane.f32.xlu0 %v637
  %v639 = vpop.xlane.xlu0 %638
  %v640 = vsel %vm26, %v636, 0.0
  %641 = vadd.xlane.f32.xlu0 %v640
  %v642 = vpop.xlane.xlu0 %641
  %v643 = vmul.f32 %v639, %v33
  %v644 = vmul.f32 %v642, %v33
  %v645 = vadd.f32 %v643, 1e-12
  %v646 = vadd.f32 %v644, 1e-12
  %v647 = vrsqrt.pop %v645
  %v648 = vrsqrt.pop %v646
  %v649 = vmul.f32 %v633, %v647
  %v650 = vmul.f32 %v634, %v648
  %v651 = vlaneseq
  %v652 = vshrl.u32 %v651, 7
  %v653 = vsub.s32 6, %v652
  %v654 = vrot.slane %v70, %v653
  %v655 = vmul.f32 %v649, %v654
  %v656 = vmul.f32 %v650, %v654
  %v657 = vlaneseq
  %v658 = vshrl.u32 %v657, 7
  %v659 = vsub.s32 7, %v658
  %v660 = vrot.slane %v70, %v659
  %v661 = vadd.f32 %v655, %v660
  %v662 = vadd.f32 %v656, %v660
  %s663 = scalar_lea.vmem %s2, 32
  %v664 = vld [vmem:[%s663] sm:$0xff]
  %v665 = vld [vmem:[%s663 + $0x8] sm:$0xff]
  %v666 = vld [vmem:[%s663 + $0x10] sm:$0xff]
  %v667 = vld [vmem:[%s663 + $0x18] sm:$0xff]
  %s668 = scalar_lea.vmem %s3, 8
  %v669 = vld [vmem:[%s668] sm:$0xff]
  %v670 = vpack.c.bf16 %v662, %v661
  %v671 = vlaneseq
  %v672 = vshrl.u32 %v671, 7
  %v673 = vsub.s32 0, %v672
  %v674 = vrot.slane %v669, %v673
  %v679 = vunpack.c.l.b16 %v664
  %v680 = vunpack.c.l.b16 %v665
  %v681 = vunpack.c.l.b16 %v666
  %v682 = vunpack.c.l.b16 %v667
  %v683 = vpack.c.b16 %v680, %v679
  %v684 = vpack.c.b16 %v682, %v681
  %v688 = vsel %vm26, %v670, 0
  %690 = vmatprep.subr.bf16.mxu0 0
  %691 = vmatpush1.bf16.msra.mxu0 0
  %692 = vmatprep.subr.bf16.mxu0 0
  %693 = vmatpush1.bf16.msra.mxu0 0
  %694 = vmatprep.subr.bf16.mxu0 0
  %695 = vmatpush1.bf16.msra.mxu0 0
  %696 = vmatprep.subr.bf16.mxu0 0
  %697 = vmatpush1.bf16.msra.mxu0 0
  %698 = vmatprep.subr.bf16.mxu0 0
  %699 = vmatpush1.bf16.msra.mxu0 0
  %700 = vmatprep.subr.bf16.mxu0 0
  %701 = vmatpush1.bf16.msra.mxu0 0
  %702 = vmatprep.subr.bf16.mxu0 0
  %703 = vmatpush1.bf16.msra.mxu0 %v684
  %704 = vmatprep.subr.bf16.mxu0 0
  %705 = vmatpush1.bf16.msra.mxu0 %v683
  %706 = vmatprep.subr.bf16.mxu0 0
  %707 = vmatpush2.bf16.msra.mxu0 0
  %708 = vmatprep.subr.bf16.mxu0 0
  %709 = vmatpush2.bf16.msra.mxu0 0
  %710 = vmatprep.subr.bf16.mxu0 0
  %711 = vmatpush2.bf16.msra.mxu0 0
  %712 = vmatprep.subr.bf16.mxu0 0
  %713 = vmatpush2.bf16.msra.mxu0 0
  %714 = vmatprep.subr.bf16.mxu0 0
  %715 = vmatpush2.bf16.msra.mxu0 0
  %716 = vmatprep.subr.bf16.mxu0 0
  %717 = vmatpush2.bf16.msra.mxu0 0
  %718 = vmatprep.subr.bf16.mxu0 0
  %719 = vmatpush2.bf16.msra.mxu0 0
  %720 = vmatprep.subr.bf16.mxu0 0
  %721 = vmatpush2.bf16.msra.mxu0 0
  %722 = vmatprep.mubr.bf16.mxu0 0
  %723 = vmatmul.mubr.bf16.gmra.mxu0 %v688
  %v724 = vpop.f32.mrf.mxu0
  %v725 = vadd.f32 %v674, %v724
  %v726 = vpop.f32.mrf.mxu0
  %v727 = vpop.f32.mrf.mxu0
  %v728 = vadd.f32 %v674, %v727
  %v729 = vpop.f32.mrf.mxu0
  %730 = vdwg.mxu0
  %v731 = vpack.c.bf16 %v728, %v725
  %733 = vrot.lane.b32.xlu0 %v731, 80
  %v734 = vpop.permute.xlu0 %733
  %735 = vrot.lane.b32.xlu0 %v731, 112
  %v736 = vpop.permute.xlu0 %735
  %v738 = vsel %vm138, %v731, 0
  %v741 = vsel %vm138, %v736, 0
  %743 = vmatprep.subr.bf16.mxu0 0
  %744 = vmatpush1.bf16.xpose.msra.mxu0 0
  %745 = vmatprep.subr.bf16.mxu0 0
  %746 = vmatpush1.bf16.xpose.msra.mxu0 0
  %747 = vmatprep.subr.bf16.mxu0 0
  %748 = vmatpush1.bf16.xpose.msra.mxu0 0
  %749 = vmatprep.subr.bf16.mxu0 0
  %750 = vmatpush1.bf16.xpose.msra.mxu0 0
  %751 = vmatprep.subr.bf16.mxu0 0
  %752 = vmatpush1.bf16.xpose.msra.mxu0 0
  %753 = vmatprep.subr.bf16.mxu0 0
  %754 = vmatpush1.bf16.xpose.msra.mxu0 0
  %755 = vmatprep.subr.bf16.mxu0 0
  %756 = vmatpush1.bf16.xpose.msra.mxu0 0
  %757 = vmatprep.subr.bf16.mxu0 0
  %758 = vmatpush1.bf16.xpose.msra.mxu0 %v741
  %759 = vmatprep.subr.bf16.mxu0 0
  %760 = vmatpush2.bf16.xpose.msra.mxu0 0
  %761 = vmatprep.subr.bf16.mxu0 0
  %762 = vmatpush2.bf16.xpose.msra.mxu0 0
  %763 = vmatprep.subr.bf16.mxu0 0
  %764 = vmatpush2.bf16.xpose.msra.mxu0 0
  %765 = vmatprep.subr.bf16.mxu0 0
  %766 = vmatpush2.bf16.xpose.msra.mxu0 0
  %767 = vmatprep.subr.bf16.mxu0 0
  %768 = vmatpush2.bf16.xpose.msra.mxu0 0
  %769 = vmatprep.subr.bf16.mxu0 0
  %770 = vmatpush2.bf16.xpose.msra.mxu0 0
  %771 = vmatprep.subr.bf16.mxu0 0
  %772 = vmatpush2.bf16.xpose.msra.mxu0 0
  %773 = vmatprep.subr.bf16.mxu0 0
  %774 = vmatpush2.bf16.xpose.msra.mxu0 0
  %775 = vmatprep.mubr.bf16.mxu0 0
  %776 = vmatmul.mubr.bf16.gmra.mxu0 %v738
  %v777 = vpop.f32.mrf.mxu0
  %v778 = vadd.f32 0.0, %v777
  %v779 = vpop.f32.mrf.mxu0
  %v780 = vpop.f32.mrf.mxu0
  %v781 = vadd.f32 0.0, %v780
  %v782 = vpop.f32.mrf.mxu0
  %783 = vdwg.mxu0
  %784 = vrot.lane.b32.xlu0 %v734, 112
  %v785 = vpop.permute.xlu0 %784
  %v787 = vsel %vm138, %v734, 0
  %v790 = vsel %vm138, %v785, 0
  %792 = vmatprep.subr.bf16.mxu0 0
  %793 = vmatpush1.bf16.xpose.msra.mxu0 0
  %794 = vmatprep.subr.bf16.mxu0 0
  %795 = vmatpush1.bf16.xpose.msra.mxu0 0
  %796 = vmatprep.subr.bf16.mxu0 0
  %797 = vmatpush1.bf16.xpose.msra.mxu0 0
  %798 = vmatprep.subr.bf16.mxu0 0
  %799 = vmatpush1.bf16.xpose.msra.mxu0 0
  %800 = vmatprep.subr.bf16.mxu0 0
  %801 = vmatpush1.bf16.xpose.msra.mxu0 0
  %802 = vmatprep.subr.bf16.mxu0 0
  %803 = vmatpush1.bf16.xpose.msra.mxu0 0
  %804 = vmatprep.subr.bf16.mxu0 0
  %805 = vmatpush1.bf16.xpose.msra.mxu0 0
  %806 = vmatprep.subr.bf16.mxu0 0
  %807 = vmatpush1.bf16.xpose.msra.mxu0 %v790
  %808 = vmatprep.subr.bf16.mxu0 0
  %809 = vmatpush2.bf16.xpose.msra.mxu0 0
  %810 = vmatprep.subr.bf16.mxu0 0
  %811 = vmatpush2.bf16.xpose.msra.mxu0 0
  %812 = vmatprep.subr.bf16.mxu0 0
  %813 = vmatpush2.bf16.xpose.msra.mxu0 0
  %814 = vmatprep.subr.bf16.mxu0 0
  %815 = vmatpush2.bf16.xpose.msra.mxu0 0
  %816 = vmatprep.subr.bf16.mxu0 0
  %817 = vmatpush2.bf16.xpose.msra.mxu0 0
  %818 = vmatprep.subr.bf16.mxu0 0
  %819 = vmatpush2.bf16.xpose.msra.mxu0 0
  %820 = vmatprep.subr.bf16.mxu0 0
  %821 = vmatpush2.bf16.xpose.msra.mxu0 0
  %822 = vmatprep.subr.bf16.mxu0 0
  %823 = vmatpush2.bf16.xpose.msra.mxu0 0
  %824 = vmatprep.mubr.bf16.mxu0 0
  %825 = vmatmul.mubr.bf16.gmra.mxu0 %v787
  %v826 = vpop.f32.mrf.mxu0
  %v827 = vadd.f32 0.0, %v826
  %v828 = vpop.f32.mrf.mxu0
  %v829 = vpop.f32.mrf.mxu0
  %v830 = vadd.f32 0.0, %v829
  %v831 = vpop.f32.mrf.mxu0
  %832 = vdwg.mxu0
  %v833 = vmul.f32 %v778, 0.25
  %v834 = vmul.f32 %v781, 0.25
  %v835 = vmul.f32 %v827, 0.25
  %v836 = vmul.f32 %v830, 0.25
  %v837 = vadd.f32 %v833, %v18
  %v838 = vadd.f32 %v834, %v19
  %v839 = vadd.f32 %v835, %v20
  %v840 = vadd.f32 %v836, %v21
  %v841 = vsel %vm138, %v837, -inf
  %842 = vmax.xlane.f32.xlu0 %v841
  %v843 = vpop.xlane.xlu0 %842
  %v844 = vsel %vm138, %v838, -inf
  %845 = vmax.xlane.f32.xlu0 %v844
  %v846 = vpop.xlane.xlu0 %845
  %v847 = vsel %vm138, %v839, -inf
  %848 = vmax.xlane.f32.xlu0 %v847
  %v849 = vpop.xlane.xlu0 %848
  %v850 = vsel %vm138, %v840, -inf
  %851 = vmax.xlane.f32.xlu0 %v850
  %v852 = vpop.xlane.xlu0 %851
  %v853 = vsub.f32 %v837, %v843
  %v854 = vsub.f32 %v838, %v846
  %v855 = vsub.f32 %v839, %v849
  %v856 = vsub.f32 %v840, %v852
  %v857 = vmul.f32 %v853, 1.442695
  %v858 = vpow.pop %v857
  %v859 = vmul.f32 %v854, 1.442695
  %v860 = vpow.pop %v859
  %v861 = vmul.f32 %v855, 1.442695
  %v862 = vpow.pop %v861
  %v863 = vmul.f32 %v856, 1.442695
  %v864 = vpow.pop %v863
  %v865 = vsel %vm138, %v858, 0.0
  %866 = vadd.xlane.f32.xlu0 %v865
  %v867 = vpop.xlane.xlu0 %866
  %v868 = vsel %vm138, %v860, 0.0
  %869 = vadd.xlane.f32.xlu0 %v868
  %v870 = vpop.xlane.xlu0 %869
  %v871 = vsel %vm138, %v862, 0.0
  %872 = vadd.xlane.f32.xlu0 %v871
  %v873 = vpop.xlane.xlu0 %872
  %v874 = vsel %vm138, %v864, 0.0
  %875 = vadd.xlane.f32.xlu0 %v874
  %v876 = vpop.xlane.xlu0 %875
  %v877 = vrcp.pop %v867
  %v878 = vrcp.pop %v870
  %v879 = vrcp.pop %v873
  %v880 = vrcp.pop %v876
  %v881 = vmul.f32 %v858, %v877
  %v882 = vmul.f32 %v860, %v878
  %v883 = vmul.f32 %v862, %v879
  %v884 = vmul.f32 %v864, %v880
  %v885 = vpack.c.bf16 %v882, %v881
  %v886 = vpack.c.bf16 %v884, %v883
  %887 = vrot.lane.b32.xlu0 %v731, 96
  %v888 = vpop.permute.xlu0 %887
  %v891 = vsel %vm138, %v885, 0
  %893 = vmatprep.subr.bf16.mxu0 0
  %894 = vmatpush1.bf16.msra.mxu0 0
  %895 = vmatprep.subr.bf16.mxu0 0
  %896 = vmatpush1.bf16.msra.mxu0 0
  %897 = vmatprep.subr.bf16.mxu0 0
  %898 = vmatpush1.bf16.msra.mxu0 0
  %899 = vmatprep.subr.bf16.mxu0 0
  %900 = vmatpush1.bf16.msra.mxu0 0
  %901 = vmatprep.subr.bf16.mxu0 0
  %902 = vmatpush1.bf16.msra.mxu0 0
  %903 = vmatprep.subr.bf16.mxu0 0
  %904 = vmatpush1.bf16.msra.mxu0 0
  %905 = vmatprep.subr.bf16.mxu0 0
  %906 = vmatpush1.bf16.msra.mxu0 0
  %907 = vmatprep.subr.bf16.mxu0 0
  %908 = vmatpush1.bf16.msra.mxu0 %v888
  %909 = vmatprep.subr.bf16.mxu0 0
  %910 = vmatpush2.bf16.msra.mxu0 0
  %911 = vmatprep.subr.bf16.mxu0 0
  %912 = vmatpush2.bf16.msra.mxu0 0
  %913 = vmatprep.subr.bf16.mxu0 0
  %914 = vmatpush2.bf16.msra.mxu0 0
  %915 = vmatprep.subr.bf16.mxu0 0
  %916 = vmatpush2.bf16.msra.mxu0 0
  %917 = vmatprep.subr.bf16.mxu0 0
  %918 = vmatpush2.bf16.msra.mxu0 0
  %919 = vmatprep.subr.bf16.mxu0 0
  %920 = vmatpush2.bf16.msra.mxu0 0
  %921 = vmatprep.subr.bf16.mxu0 0
  %922 = vmatpush2.bf16.msra.mxu0 0
  %923 = vmatprep.subr.bf16.mxu0 0
  %924 = vmatpush2.bf16.msra.mxu0 0
  %925 = vmatprep.mubr.bf16.mxu0 0
  %926 = vmatmul.mubr.bf16.gmra.mxu0 %v891
  %v927 = vpop.f32.mrf.mxu0
  %v928 = vadd.f32 0.0, %v927
  %v929 = vpop.f32.mrf.mxu0
  %v930 = vpop.f32.mrf.mxu0
  %v931 = vadd.f32 0.0, %v930
  %v932 = vpop.f32.mrf.mxu0
  %933 = vdwg.mxu0
  %934 = vrot.lane.b32.xlu0 %v734, 96
  %v935 = vpop.permute.xlu0 %934
  %v938 = vsel %vm138, %v886, 0
  %940 = vmatprep.subr.bf16.mxu0 0
  %941 = vmatpush1.bf16.msra.mxu0 0
  %942 = vmatprep.subr.bf16.mxu0 0
  %943 = vmatpush1.bf16.msra.mxu0 0
  %944 = vmatprep.subr.bf16.mxu0 0
  %945 = vmatpush1.bf16.msra.mxu0 0
  %946 = vmatprep.subr.bf16.mxu0 0
  %947 = vmatpush1.bf16.msra.mxu0 0
  %948 = vmatprep.subr.bf16.mxu0 0
  %949 = vmatpush1.bf16.msra.mxu0 0
  %950 = vmatprep.subr.bf16.mxu0 0
  %951 = vmatpush1.bf16.msra.mxu0 0
  %952 = vmatprep.subr.bf16.mxu0 0
  %953 = vmatpush1.bf16.msra.mxu0 0
  %954 = vmatprep.subr.bf16.mxu0 0
  %955 = vmatpush1.bf16.msra.mxu0 %v935
  %956 = vmatprep.subr.bf16.mxu0 0
  %957 = vmatpush2.bf16.msra.mxu0 0
  %958 = vmatprep.subr.bf16.mxu0 0
  %959 = vmatpush2.bf16.msra.mxu0 0
  %960 = vmatprep.subr.bf16.mxu0 0
  %961 = vmatpush2.bf16.msra.mxu0 0
  %962 = vmatprep.subr.bf16.mxu0 0
  %963 = vmatpush2.bf16.msra.mxu0 0
  %964 = vmatprep.subr.bf16.mxu0 0
  %965 = vmatpush2.bf16.msra.mxu0 0
  %966 = vmatprep.subr.bf16.mxu0 0
  %967 = vmatpush2.bf16.msra.mxu0 0
  %968 = vmatprep.subr.bf16.mxu0 0
  %969 = vmatpush2.bf16.msra.mxu0 0
  %970 = vmatprep.subr.bf16.mxu0 0
  %971 = vmatpush2.bf16.msra.mxu0 0
  %972 = vmatprep.mubr.bf16.mxu0 0
  %973 = vmatmul.mubr.bf16.gmra.mxu0 %v938
  %v974 = vpop.f32.mrf.mxu0
  %v975 = vadd.f32 0.0, %v974
  %v976 = vpop.f32.mrf.mxu0
  %v977 = vpop.f32.mrf.mxu0
  %v978 = vadd.f32 0.0, %v977
  %v979 = vpop.f32.mrf.mxu0
  %980 = vdwg.mxu0
  %983 = vrot.lane.b32.xlu0 %v975, 16
  %v984 = vpop.permute.xlu0 %983
  %985 = vrot.lane.b32.xlu0 %v978, 16
  %v986 = vpop.permute.xlu0 %985
  %v989 = vsel %vm138, %v928, %v984
  %v990 = vsel %vm138, %v931, %v986
  %v991 = vpack.c.bf16 %v990, %v989
  %v992 = vlaneseq
  %v993 = vshrl.u32 %v992, 7
  %v994 = vsub.s32 1, %v993
  %v995 = vrot.slane %v669, %v994
  %996 = vrot.lane.b32.xlu0 %v683, 32
  %v997 = vpop.permute.xlu0 %996
  %998 = vrot.lane.b32.xlu0 %v684, 32
  %v999 = vpop.permute.xlu0 %998
  %v1003 = vsel %vm26, %v991, 0
  %1005 = vmatprep.subr.bf16.mxu0 0
  %1006 = vmatpush1.bf16.msra.mxu0 0
  %1007 = vmatprep.subr.bf16.mxu0 0
  %1008 = vmatpush1.bf16.msra.mxu0 0
  %1009 = vmatprep.subr.bf16.mxu0 0
  %1010 = vmatpush1.bf16.msra.mxu0 0
  %1011 = vmatprep.subr.bf16.mxu0 0
  %1012 = vmatpush1.bf16.msra.mxu0 0
  %1013 = vmatprep.subr.bf16.mxu0 0
  %1014 = vmatpush1.bf16.msra.mxu0 0
  %1015 = vmatprep.subr.bf16.mxu0 0
  %1016 = vmatpush1.bf16.msra.mxu0 0
  %1017 = vmatprep.subr.bf16.mxu0 0
  %1018 = vmatpush1.bf16.msra.mxu0 %v999
  %1019 = vmatprep.subr.bf16.mxu0 0
  %1020 = vmatpush1.bf16.msra.mxu0 %v997
  %1021 = vmatprep.subr.bf16.mxu0 0
  %1022 = vmatpush2.bf16.msra.mxu0 0
  %1023 = vmatprep.subr.bf16.mxu0 0
  %1024 = vmatpush2.bf16.msra.mxu0 0
  %1025 = vmatprep.subr.bf16.mxu0 0
  %1026 = vmatpush2.bf16.msra.mxu0 0
  %1027 = vmatprep.subr.bf16.mxu0 0
  %1028 = vmatpush2.bf16.msra.mxu0 0
  %1029 = vmatprep.subr.bf16.mxu0 0
  %1030 = vmatpush2.bf16.msra.mxu0 0
  %1031 = vmatprep.subr.bf16.mxu0 0
  %1032 = vmatpush2.bf16.msra.mxu0 0
  %1033 = vmatprep.subr.bf16.mxu0 0
  %1034 = vmatpush2.bf16.msra.mxu0 0
  %1035 = vmatprep.subr.bf16.mxu0 0
  %1036 = vmatpush2.bf16.msra.mxu0 0
  %1037 = vmatprep.mubr.bf16.mxu0 0
  %1038 = vmatmul.mubr.bf16.gmra.mxu0 %v1003
  %v1039 = vpop.f32.mrf.mxu0
  %v1040 = vadd.f32 %v995, %v1039
  %v1041 = vpop.f32.mrf.mxu0
  %v1042 = vpop.f32.mrf.mxu0
  %v1043 = vadd.f32 %v995, %v1042
  %v1044 = vpop.f32.mrf.mxu0
  %1045 = vdwg.mxu0
  %v1046 = vadd.f32 %v1040, %v661
  %v1047 = vadd.f32 %v1043, %v662
  %v1048 = vsel %vm26, %v1046, 0.0
  %1049 = vadd.xlane.f32.xlu0 %v1048
  %v1050 = vpop.xlane.xlu0 %1049
  %v1051 = vsel %vm26, %v1047, 0.0
  %1052 = vadd.xlane.f32.xlu0 %v1051
  %v1053 = vpop.xlane.xlu0 %1052
  %v1054 = vmul.f32 %v1050, %v33
  %v1055 = vmul.f32 %v1053, %v33
  %v1056 = vsub.f32 %v1046, %v1054
  %v1057 = vsub.f32 %v1047, %v1055
  %v1058 = vmul.f32 %v1056, %v1056
  %v1059 = vmul.f32 %v1057, %v1057
  %v1060 = vsel %vm26, %v1058, 0.0
  %1061 = vadd.xlane.f32.xlu0 %v1060
  %v1062 = vpop.xlane.xlu0 %1061
  %v1063 = vsel %vm26, %v1059, 0.0
  %1064 = vadd.xlane.f32.xlu0 %v1063
  %v1065 = vpop.xlane.xlu0 %1064
  %v1066 = vmul.f32 %v1062, %v33
  %v1067 = vmul.f32 %v1065, %v33
  %v1068 = vadd.f32 %v1066, 1e-12
  %v1069 = vadd.f32 %v1067, 1e-12
  %v1070 = vrsqrt.pop %v1068
  %v1071 = vrsqrt.pop %v1069
  %v1072 = vmul.f32 %v1056, %v1070
  %v1073 = vmul.f32 %v1057, %v1071
  %v1074 = vlaneseq
  %v1075 = vshrl.u32 %v1074, 7
  %v1076 = vsub.s32 2, %v1075
  %v1077 = vrot.slane %v669, %v1076
  %v1078 = vmul.f32 %v1072, %v1077
  %v1079 = vmul.f32 %v1073, %v1077
  %v1080 = vlaneseq
  %v1081 = vshrl.u32 %v1080, 7
  %v1082 = vsub.s32 3, %v1081
  %v1083 = vrot.slane %v669, %v1082
  %v1084 = vadd.f32 %v1078, %v1083
  %v1085 = vadd.f32 %v1079, %v1083
  %v1086 = vpack.c.bf16 %v1085, %v1084
  %v1087 = vlaneseq
  %v1088 = vshrl.u32 %v1087, 7
  %v1089 = vsub.s32 4, %v1088
  %v1090 = vrot.slane %v669, %v1089
  %v1091 = vunpack.c.h.b16 %v664
  %v1092 = vunpack.c.h.b16 %v665
  %v1093 = vunpack.c.h.b16 %v666
  %v1094 = vunpack.c.h.b16 %v667
  %v1095 = vpack.c.b16 %v1092, %v1091
  %v1096 = vpack.c.b16 %v1094, %v1093
  %v1100 = vsel %vm26, %v1086, 0
  %1102 = vmatprep.subr.bf16.mxu0 0
  %1103 = vmatpush1.bf16.msra.mxu0 0
  %1104 = vmatprep.subr.bf16.mxu0 0
  %1105 = vmatpush1.bf16.msra.mxu0 0
  %1106 = vmatprep.subr.bf16.mxu0 0
  %1107 = vmatpush1.bf16.msra.mxu0 0
  %1108 = vmatprep.subr.bf16.mxu0 0
  %1109 = vmatpush1.bf16.msra.mxu0 0
  %1110 = vmatprep.subr.bf16.mxu0 0
  %1111 = vmatpush1.bf16.msra.mxu0 0
  %1112 = vmatprep.subr.bf16.mxu0 0
  %1113 = vmatpush1.bf16.msra.mxu0 0
  %1114 = vmatprep.subr.bf16.mxu0 0
  %1115 = vmatpush1.bf16.msra.mxu0 %v1096
  %1116 = vmatprep.subr.bf16.mxu0 0
  %1117 = vmatpush1.bf16.msra.mxu0 %v1095
  %1118 = vmatprep.subr.bf16.mxu0 0
  %1119 = vmatpush2.bf16.msra.mxu0 0
  %1120 = vmatprep.subr.bf16.mxu0 0
  %1121 = vmatpush2.bf16.msra.mxu0 0
  %1122 = vmatprep.subr.bf16.mxu0 0
  %1123 = vmatpush2.bf16.msra.mxu0 0
  %1124 = vmatprep.subr.bf16.mxu0 0
  %1125 = vmatpush2.bf16.msra.mxu0 0
  %1126 = vmatprep.subr.bf16.mxu0 0
  %1127 = vmatpush2.bf16.msra.mxu0 0
  %1128 = vmatprep.subr.bf16.mxu0 0
  %1129 = vmatpush2.bf16.msra.mxu0 0
  %1130 = vmatprep.subr.bf16.mxu0 0
  %1131 = vmatpush2.bf16.msra.mxu0 0
  %1132 = vmatprep.subr.bf16.mxu0 0
  %1133 = vmatpush2.bf16.msra.mxu0 0
  %1134 = vmatprep.mubr.bf16.mxu0 0
  %1135 = vmatmul.mubr.bf16.gmra.mxu0 %v1100
  %v1136 = vpop.f32.mrf.mxu0
  %v1137 = vadd.f32 %v1090, %v1136
  %v1138 = vpop.f32.mrf.mxu0
  %v1139 = vpop.f32.mrf.mxu0
  %v1140 = vadd.f32 %v1090, %v1139
  %v1141 = vpop.f32.mrf.mxu0
  %1142 = vdwg.mxu0
  %v1143 = vmul.f32 %v1137, 0.5
  %v1144 = vmul.f32 %v1140, 0.5
  %v1145 = vmul.f32 %v1137, 0.044715
  %v1146 = vmul.f32 %v1140, 0.044715
  %v1147 = vmul.f32 %v1145, %v1137
  %v1148 = vmul.f32 %v1146, %v1140
  %v1149 = vmul.f32 %v1147, %v1137
  %v1150 = vmul.f32 %v1148, %v1140
  %v1151 = vadd.f32 %v1137, %v1149
  %v1152 = vadd.f32 %v1140, %v1150
  %v1153 = vmul.f32 %v1151, 0.7978846
  %v1154 = vmul.f32 %v1152, 0.7978846
  %v1155 = vtanh.pop %v1153
  %v1156 = vtanh.pop %v1154
  %v1157 = vadd.f32 %v1155, 1.0
  %v1158 = vadd.f32 %v1156, 1.0
  %v1159 = vmul.f32 %v1143, %v1157
  %v1160 = vmul.f32 %v1144, %v1158
  %v1161 = vpack.c.bf16 %v1160, %v1159
  %v1162 = vlaneseq
  %v1163 = vshrl.u32 %v1162, 7
  %v1164 = vsub.s32 5, %v1163
  %v1165 = vrot.slane %v669, %v1164
  %1166 = vrot.lane.b32.xlu0 %v1095, 64
  %v1167 = vpop.permute.xlu0 %1166
  %1168 = vrot.lane.b32.xlu0 %v1096, 64
  %v1169 = vpop.permute.xlu0 %1168
  %v1171 = vsel %vm572, %v1161, 0
  %v1174 = vsel %vm572, %v1167, 0
  %v1177 = vsel %vm572, %v1169, 0
  %1179 = vmatprep.subr.bf16.mxu0 0
  %1180 = vmatpush1.bf16.xpose.msra.mxu0 0
  %1181 = vmatprep.subr.bf16.mxu0 0
  %1182 = vmatpush1.bf16.xpose.msra.mxu0 0
  %1183 = vmatprep.subr.bf16.mxu0 0
  %1184 = vmatpush1.bf16.xpose.msra.mxu0 0
  %1185 = vmatprep.subr.bf16.mxu0 0
  %1186 = vmatpush1.bf16.xpose.msra.mxu0 0
  %1187 = vmatprep.subr.bf16.mxu0 0
  %1188 = vmatpush1.bf16.xpose.msra.mxu0 0
  %1189 = vmatprep.subr.bf16.mxu0 0
  %1190 = vmatpush1.bf16.xpose.msra.mxu0 0
  %1191 = vmatprep.subr.bf16.mxu0 0
  %1192 = vmatpush1.bf16.xpose.msra.mxu0 %v1177
  %1193 = vmatprep.subr.bf16.mxu0 0
  %1194 = vmatpush1.bf16.xpose.msra.mxu0 %v1174
  %1195 = vmatprep.subr.bf16.mxu0 0
  %1196 = vmatpush2.bf16.xpose.msra.mxu0 0
  %1197 = vmatprep.subr.bf16.mxu0 0
  %1198 = vmatpush2.bf16.xpose.msra.mxu0 0
  %1199 = vmatprep.subr.bf16.mxu0 0
  %1200 = vmatpush2.bf16.xpose.msra.mxu0 0
  %1201 = vmatprep.subr.bf16.mxu0 0
  %1202 = vmatpush2.bf16.xpose.msra.mxu0 0
  %1203 = vmatprep.subr.bf16.mxu0 0
  %1204 = vmatpush2.bf16.xpose.msra.mxu0 0
  %1205 = vmatprep.subr.bf16.mxu0 0
  %1206 = vmatpush2.bf16.xpose.msra.mxu0 0
  %1207 = vmatprep.subr.bf16.mxu0 0
  %1208 = vmatpush2.bf16.xpose.msra.mxu0 0
  %1209 = vmatprep.subr.bf16.mxu0 0
  %1210 = vmatpush2.bf16.xpose.msra.mxu0 0
  %1211 = vmatprep.mubr.bf16.mxu0 0
  %1212 = vmatmul.mubr.bf16.gmra.mxu0 %v1171
  %v1213 = vpop.f32.mrf.mxu0
  %v1214 = vadd.f32 %v1165, %v1213
  %v1215 = vpop.f32.mrf.mxu0
  %v1216 = vpop.f32.mrf.mxu0
  %v1217 = vadd.f32 %v1165, %v1216
  %v1218 = vpop.f32.mrf.mxu0
  %1219 = vdwg.mxu0
  %v1220 = vadd.f32 %v1214, %v1084
  %v1221 = vadd.f32 %v1217, %v1085
  %v1222 = vsel %vm26, %v1220, 0.0
  %1223 = vadd.xlane.f32.xlu0 %v1222
  %v1224 = vpop.xlane.xlu0 %1223
  %v1225 = vsel %vm26, %v1221, 0.0
  %1226 = vadd.xlane.f32.xlu0 %v1225
  %v1227 = vpop.xlane.xlu0 %1226
  %v1228 = vmul.f32 %v1224, %v33
  %v1229 = vmul.f32 %v1227, %v33
  %v1230 = vsub.f32 %v1220, %v1228
  %v1231 = vsub.f32 %v1221, %v1229
  %v1232 = vmul.f32 %v1230, %v1230
  %v1233 = vmul.f32 %v1231, %v1231
  %v1234 = vsel %vm26, %v1232, 0.0
  %1235 = vadd.xlane.f32.xlu0 %v1234
  %v1236 = vpop.xlane.xlu0 %1235
  %v1237 = vsel %vm26, %v1233, 0.0
  %1238 = vadd.xlane.f32.xlu0 %v1237
  %v1239 = vpop.xlane.xlu0 %1238
  %v1240 = vmul.f32 %v1236, %v33
  %v1241 = vmul.f32 %v1239, %v33
  %v1242 = vadd.f32 %v1240, 1e-12
  %v1243 = vadd.f32 %v1241, 1e-12
  %v1244 = vrsqrt.pop %v1242
  %v1245 = vrsqrt.pop %v1243
  %v1246 = vmul.f32 %v1230, %v1244
  %v1247 = vmul.f32 %v1231, %v1245
  %v1248 = vlaneseq
  %v1249 = vshrl.u32 %v1248, 7
  %v1250 = vsub.s32 6, %v1249
  %v1251 = vrot.slane %v669, %v1250
  %v1252 = vmul.f32 %v1246, %v1251
  %v1253 = vmul.f32 %v1247, %v1251
  %v1254 = vlaneseq
  %v1255 = vshrl.u32 %v1254, 7
  %v1256 = vsub.s32 7, %v1255
  %v1257 = vrot.slane %v669, %v1256
  %v1258 = vadd.f32 %v1252, %v1257
  %v1259 = vadd.f32 %v1253, %v1257
  %s1260 = scalar_lea.vmem %s2, 64
  %v1261 = vld [vmem:[%s1260] sm:$0xff]
  %v1262 = vld [vmem:[%s1260 + $0x8] sm:$0xff]
  %v1263 = vld [vmem:[%s1260 + $0x10] sm:$0xff]
  %v1264 = vld [vmem:[%s1260 + $0x18] sm:$0xff]
  %v1265 = vpack.c.bf16 %v1259, %v1258
  %v1266 = vlaneseq
  %v1267 = vshrl.u32 %v1266, 7
  %v1268 = vsub.s32 2, %v1267
  %v1269 = vrot.slane %v23, %v1268
  %v1274 = vunpack.c.l.b16 %v1261
  %v1275 = vunpack.c.l.b16 %v1262
  %v1276 = vunpack.c.l.b16 %v1263
  %v1277 = vunpack.c.l.b16 %v1264
  %v1278 = vpack.c.b16 %v1275, %v1274
  %v1279 = vpack.c.b16 %v1277, %v1276
  %v1283 = vsel %vm26, %v1265, 0
  %1285 = vmatprep.subr.bf16.mxu0 0
  %1286 = vmatpush1.bf16.msra.mxu0 0
  %1287 = vmatprep.subr.bf16.mxu0 0
  %1288 = vmatpush1.bf16.msra.mxu0 0
  %1289 = vmatprep.subr.bf16.mxu0 0
  %1290 = vmatpush1.bf16.msra.mxu0 0
  %1291 = vmatprep.subr.bf16.mxu0 0
  %1292 = vmatpush1.bf16.msra.mxu0 0
  %1293 = vmatprep.subr.bf16.mxu0 0
  %1294 = vmatpush1.bf16.msra.mxu0 0
  %1295 = vmatprep.subr.bf16.mxu0 0
  %1296 = vmatpush1.bf16.msra.mxu0 0
  %1297 = vmatprep.subr.bf16.mxu0 0
  %1298 = vmatpush1.bf16.msra.mxu0 %v1279
  %1299 = vmatprep.subr.bf16.mxu0 0
  %1300 = vmatpush1.bf16.msra.mxu0 %v1278
  %1301 = vmatprep.subr.bf16.mxu0 0
  %1302 = vmatpush2.bf16.msra.mxu0 0
  %1303 = vmatprep.subr.bf16.mxu0 0
  %1304 = vmatpush2.bf16.msra.mxu0 0
  %1305 = vmatprep.subr.bf16.mxu0 0
  %1306 = vmatpush2.bf16.msra.mxu0 0
  %1307 = vmatprep.subr.bf16.mxu0 0
  %1308 = vmatpush2.bf16.msra.mxu0 0
  %1309 = vmatprep.subr.bf16.mxu0 0
  %1310 = vmatpush2.bf16.msra.mxu0 0
  %1311 = vmatprep.subr.bf16.mxu0 0
  %1312 = vmatpush2.bf16.msra.mxu0 0
  %1313 = vmatprep.subr.bf16.mxu0 0
  %1314 = vmatpush2.bf16.msra.mxu0 0
  %1315 = vmatprep.subr.bf16.mxu0 0
  %1316 = vmatpush2.bf16.msra.mxu0 0
  %1317 = vmatprep.mubr.bf16.mxu0 0
  %1318 = vmatmul.mubr.bf16.gmra.mxu0 %v1283
  %v1319 = vpop.f32.mrf.mxu0
  %v1320 = vadd.f32 %v1269, %v1319
  %v1321 = vpop.f32.mrf.mxu0
  %v1322 = vpop.f32.mrf.mxu0
  %v1323 = vadd.f32 %v1269, %v1322
  %v1324 = vpop.f32.mrf.mxu0
  %1325 = vdwg.mxu0
  %v1326 = vtanh.pop %v1320
  %v1327 = vtanh.pop %v1323
  %v1328 = vpack.c.bf16 %v1327, %v1326
  %v1329 = vlaneseq
  %v1330 = vshrl.u32 %v1329, 7
  %v1331 = vsub.s32 3, %v1330
  %v1332 = vrot.slane %v23, %v1331
  %1333 = vrot.lane.b32.xlu0 %v1278, 96
  %v1334 = vpop.permute.xlu0 %1333
  %1335 = vrot.lane.b32.xlu0 %v1279, 96
  %v1336 = vpop.permute.xlu0 %1335
  %v1340 = vsel %vm26, %v1328, 0
  %1342 = vmatprep.subr.bf16.mxu0 0
  %1343 = vmatpush1.bf16.msra.mxu0 0
  %1344 = vmatprep.subr.bf16.mxu0 0
  %1345 = vmatpush1.bf16.msra.mxu0 0
  %1346 = vmatprep.subr.bf16.mxu0 0
  %1347 = vmatpush1.bf16.msra.mxu0 0
  %1348 = vmatprep.subr.bf16.mxu0 0
  %1349 = vmatpush1.bf16.msra.mxu0 0
  %1350 = vmatprep.subr.bf16.mxu0 0
  %1351 = vmatpush1.bf16.msra.mxu0 0
  %1352 = vmatprep.subr.bf16.mxu0 0
  %1353 = vmatpush1.bf16.msra.mxu0 0
  %1354 = vmatprep.subr.bf16.mxu0 0
  %1355 = vmatpush1.bf16.msra.mxu0 %v1336
  %1356 = vmatprep.subr.bf16.mxu0 0
  %1357 = vmatpush1.bf16.msra.mxu0 %v1334
  %1358 = vmatprep.subr.bf16.mxu0 0
  %1359 = vmatpush2.bf16.msra.mxu0 0
  %1360 = vmatprep.subr.bf16.mxu0 0
  %1361 = vmatpush2.bf16.msra.mxu0 0
  %1362 = vmatprep.subr.bf16.mxu0 0
  %1363 = vmatpush2.bf16.msra.mxu0 0
  %1364 = vmatprep.subr.bf16.mxu0 0
  %1365 = vmatpush2.bf16.msra.mxu0 0
  %1366 = vmatprep.subr.bf16.mxu0 0
  %1367 = vmatpush2.bf16.msra.mxu0 0
  %1368 = vmatprep.subr.bf16.mxu0 0
  %1369 = vmatpush2.bf16.msra.mxu0 0
  %1370 = vmatprep.subr.bf16.mxu0 0
  %1371 = vmatpush2.bf16.msra.mxu0 0
  %1372 = vmatprep.subr.bf16.mxu0 0
  %1373 = vmatpush2.bf16.msra.mxu0 0
  %1374 = vmatprep.mubr.bf16.mxu0 0
  %1375 = vmatmul.mubr.bf16.gmra.mxu0 %v1340
  %v1376 = vpop.f32.mrf.mxu0
  %v1377 = vadd.f32 %v1332, %v1376
  %v1378 = vpop.f32.mrf.mxu0
  %v1379 = vpop.f32.mrf.mxu0
  %v1380 = vadd.f32 %v1332, %v1379
  %v1381 = vpop.f32.mrf.mxu0
  %1382 = vdwg.mxu0
  %vm1383 = vcmask 39936
  %1384 = vst.msk [vmem:[%s4] sm:$0xff] %vm1383, %v1377
  %1385 = vst.msk [vmem:[%s4 + $0x8] sm:$0xff] %vm1383, %v1380
  // Predicated region
  $region18: #{misinformation_forward.1} parent=0 // pred_check
    _
  $region19: #{misinformation_forward.1} parent=0 // pred_check_branch
    %1387 = sbr.rel (0) target = $region21
  $region20: #{misinformation_forward.1} parent=0 // pred_region
    _
  $region21: #{misinformation_forward.1} parent=0 // pred_fallthru
    _
  // Predicated region
  $region22: #{misinformation_forward.1} parent=0 // pred_check
    _
  $region23: #{misinformation_forward.1} parent=0 // pred_check_branch
    %1389 = sbr.rel (0) target = $region25
  $region24: #{misinformation_forward.1} parent=0 // pred_region
    _
  $region25: #{misinformation_forward.1} parent=0 // pred_fallthru
    _

</llo_original>
